<compile_context>
chip_gen: v5e
topology: v5e:2x2
jax: 0.10.0
libtpu: 0.0.40
codegen_flags: <defaults>
</compile_context>

<pallas_src>
import functools
from dataclasses import dataclass

import jax
import jax.numpy as jnp
from jax.experimental import pallas as pl
from jax.experimental.pallas import tpu as pltpu

EPS = 1e-6                                   # T5 layer_norm_epsilon
NEG_INF = float(jnp.finfo(jnp.float32).min)  # HF extended-attention-mask value


@dataclass
class EyeT5Config:
    in_dim_numeric: int = 6
    d_model: int = 32
    n_encoder_layers: int = 2
    n_heads: int = 4
    d_kv: int = 8            # d_model // n_heads
    k_tokens: int = 3
    dropout: float = 0.0
    rel_pos_buckets: int = 32
    rel_pos_max_distance: int = 128


# ----------------------------- in-kernel helpers -----------------------------

def _rms(x, w):
    var = jnp.mean(x * x, axis=-1, keepdims=True)
    return x * jax.lax.rsqrt(var + EPS) * w


def _softmax_kernel(x):
    # kernel-side softmax: EUP reciprocal instead of a VALU divide
    m = jnp.max(x, axis=-1, keepdims=True)
    e = jnp.exp(x - m)
    return e * pl.reciprocal(jnp.sum(e, axis=-1, keepdims=True), approx=True)


# ------------------------------- fused kernel --------------------------------

def _fused_kernel(B, L, n_layers, n_heads, d_kv,
                  x_ref,      # (B*L, Din_pad)
                  mf_ref,     # (B, L)  float mask
                  pb_ref,     # (H, L, L)  relative position bias (shared)
                  inw_ref,    # (Din_pad, D)
                  inb_ref,    # (1, D)
                  ln1_ref,    # (NL, 1, D)
                  wqkv_ref,   # (NL, H, D, 3*d_kv)   head-major fused QKV
                  wo_ref,     # (NL, H, d_kv, D)     head-major Wo
                  ln2_ref,    # (NL, 1, D)
                  wi_ref,     # (NL, D, dff)
                  wff_ref,    # (NL, dff, D)
                  fln_ref,    # (1, D)
                  poolq_ref,  # (K, D)
                  o_ref):     # (B, K, D)
    f32 = jnp.float32
    D = inw_ref.shape[1]
    K = poolq_ref.shape[0]
    H, dkv = n_heads, d_kv
    BH = B * H

    mf = mf_ref[...]                                           # (B, L)

    # Attention bias shared by every layer: rel-pos bias + HF extended mask.
    bias = (pb_ref[...][None]
            + ((1.0 - mf) * NEG_INF)[:, None, None, :])        # (B, H, L, L)
    bias = bias.reshape(BH, L, L)

    # ---- in_proj over the whole (B*L) row block ----
    h = jnp.dot(x_ref[...], inw_ref[...],
                preferred_element_type=f32) + inb_ref[...]     # (B*L, D)

    # ---- encoder layers (statically unrolled) ----
    for l in range(n_layers):
        # -- self-attention block: RMS -> batched QKV -> batched attn -> Wo --
        xn = _rms(h, ln1_ref[l])                               # (B*L, D)
        xn_g = jnp.broadcast_to(xn.reshape(B, 1, L, D),
                                (B, H, L, D)).reshape(BH, L, D)
        w_g = jnp.broadcast_to(wqkv_ref[l][None],
                               (B, H, D, 3 * dkv)).reshape(BH, D, 3 * dkv)
        qkv = jnp.einsum('gld,gde->gle', xn_g, w_g,
                         preferred_element_type=f32)           # (BH, L, 3*dkv)
        q = qkv[:, :, :dkv]
        k = qkv[:, :, dkv:2 * dkv]
        v = qkv[:, :, 2 * dkv:]

        # T5: no 1/sqrt(d) scaling; bias already contains the mask.
        scores = jnp.einsum('gqd,gkd->gqk', q, k,
                            preferred_element_type=f32) + bias  # (BH, L, L)
        attn = _softmax_kernel(scores)
        ctx = jnp.einsum('gqk,gkd->gqd', attn, v,
                         preferred_element_type=f32)            # (BH, L, dkv)

        wo_g = jnp.broadcast_to(wo_ref[l][None],
                                (B, H, dkv, D)).reshape(BH, dkv, D)
        attn_out = jnp.einsum('gqd,gde->gqe', ctx, wo_g,
                              preferred_element_type=f32)       # (BH, L, D)
        attn_out = attn_out.reshape(B, H, L, D).sum(axis=1)     # (B, L, D)
        h = h + attn_out.reshape(B * L, D)                      # residual

        # -- feed-forward block: RMS -> Dense(d_ff) -> ReLU -> Dense(D) --
        xn = _rms(h, ln2_ref[l])
        hid = jnp.maximum(jnp.dot(xn, wi_ref[l],
                                  preferred_element_type=f32), 0.0)
        h = h + jnp.dot(hid, wff_ref[l], preferred_element_type=f32)

    # ---- final T5 RMS norm ----
    h = _rms(h, fln_ref[...])
    h3 = h.reshape(B, L, D)

    # ---- attention pooling ----
    pq = jnp.broadcast_to(poolq_ref[...][None], (B, K, D))
    logits = jnp.einsum('bkd,bld->bkl', pq, h3,
                        preferred_element_type=f32)             # (B, K, L)
    logits = jnp.where(mf[:, None, :] > 0.5, logits, -10000.0)
    attn = _softmax_kernel(logits)
    o_ref[...] = jnp.einsum('bkl,bld->bkd', attn, h3,
                            preferred_element_type=f32)         # (B, K, D)


# ------------------------------ pallas wrapper --------------------------------

def eye_encoder_t5_pallas(cfg, packed, pos_bias, x_num, mask):
    B, L, Din = x_num.shape
    D = cfg.d_model
    K = cfg.k_tokens
    H = cfg.n_heads
    NL = cfg.n_encoder_layers
    dkv = cfg.d_kv
    dff = packed["wi"].shape[2]
    din_pad = packed["in_w"].shape[0]

    # TODO(synk): move this pad/reshape into the data pipeline so only the
    # pallas_call remains on the per-step path.
    if Din < din_pad:
        x_num = jnp.pad(x_num, ((0, 0), (0, 0), (0, din_pad - Din)))
    x2d = x_num.reshape(B * L, din_pad)
    mask_f = mask.astype(jnp.float32)                          # (B, L)

    kernel = functools.partial(_fused_kernel, B, L, NL, H, dkv)
    z2 = lambda i: (0, 0)
    z3 = lambda i: (0, 0, 0)
    z4 = lambda i: (0, 0, 0, 0)

    return pl.pallas_call(
        kernel,
        grid=(1,),                       # whole batch folded into one step
        in_specs=[
            pl.BlockSpec((B * L, din_pad), z2),                # x (rows)
            pl.BlockSpec((B, L), z2),                          # mask_f
            pl.BlockSpec((H, L, L), z3),                       # pos_bias
            pl.BlockSpec((din_pad, D), z2),                    # in_w
            pl.BlockSpec((1, D), z2),                          # in_b
            pl.BlockSpec((NL, 1, D), z3),                      # ln1
            pl.BlockSpec((NL, H, D, 3 * dkv), z4),             # wqkv (head-major)
            pl.BlockSpec((NL, H, dkv, D), z4),                 # wo   (head-major)
            pl.BlockSpec((NL, 1, D), z3),                      # ln2
            pl.BlockSpec((NL, D, dff), z3),                    # wi
            pl.BlockSpec((NL, dff, D), z3),                    # wff
            pl.BlockSpec((1, D), z2),                          # final_ln
            pl.BlockSpec((K, D), z2),                          # pool_q
        ],
        out_specs=pl.BlockSpec((B, K, D), z3),
        out_shape=jax.ShapeDtypeStruct((B, K, D), jnp.float32),
        compiler_params=pltpu.CompilerParams(
            dimension_semantics=("arbitrary",)),
    )(x2d, mask_f, pos_bias,
      packed["in_w"], packed["in_b"],
      packed["ln1"], packed["wqkv_h"], packed["wo_h"],
      packed["ln2"], packed["wi"], packed["wff"],
      packed["final_ln"], packed["pool_q"])


# --------------------------- glue (plain JAX setup) ----------------------------

def _relative_position_bucket(rel_pos, num_buckets, max_distance):
    # bidirectional bucketing, as in HF T5Attention._relative_position_bucket
    num_buckets //= 2
    rb = (rel_pos > 0).astype(jnp.int32) * num_buckets
    n = jnp.abs(rel_pos)
    max_exact = num_buckets // 2
    is_small = n < max_exact
    n_safe = jnp.maximum(n, 1)
    val_if_large = max_exact + (
        jnp.log(n_safe.astype(jnp.float32) / max_exact)
        / jnp.log(max_distance / max_exact)
        * (num_buckets - max_exact)
    ).astype(jnp.int32)
    val_if_large = jnp.minimum(val_if_large, num_buckets - 1)
    return rb + jnp.where(is_small, n, val_if_large)


def compute_position_bias(cfg, rel_bias, L):
    ctx = jnp.arange(L)[:, None]
    mem = jnp.arange(L)[None, :]
    buckets = _relative_position_bucket(mem - ctx, cfg.rel_pos_buckets,
                                        cfg.rel_pos_max_distance)
    bias = rel_bias[buckets]                  # (L, L, H) gather (plain-JAX glue)
    return jnp.transpose(bias, (2, 0, 1))     # (H, L, L)


def init_params(cfg, key):
    d, dff, inner = cfg.d_model, cfg.d_model * 4, cfg.n_heads * cfg.d_kv

    def nrm(k, shape, scale=0.05):
        return scale * jax.random.normal(k, shape, jnp.float32)

    ks = iter(jax.random.split(key, 8 + 8 * cfg.n_encoder_layers))
    params = dict(
        in_w=nrm(next(ks), (cfg.in_dim_numeric, d)),
        in_b=nrm(next(ks), (1, d)),
        rel_bias=nrm(next(ks), (cfg.rel_pos_buckets, cfg.n_heads)),
        final_ln=jnp.ones((1, d), jnp.float32),
        pool_q=jax.random.normal(next(ks), (cfg.k_tokens, d), jnp.float32),
        layers=[],
    )
    for _ in range(cfg.n_encoder_layers):
        params["layers"].append(dict(
            ln1=jnp.ones((1, d), jnp.float32),
            wq=nrm(next(ks), (d, inner)),
            wk=nrm(next(ks), (d, inner)),
            wv=nrm(next(ks), (d, inner)),
            wo=nrm(next(ks), (inner, d)),
            ln2=jnp.ones((1, d), jnp.float32),
            wi=nrm(next(ks), (d, dff)),
            wff=nrm(next(ks), (dff, d)),
        ))
    return params


def pack_params(cfg, params):
    """One-time host-side repack: pad in_w to 8 rows, head-major QKV/Wo, stack layers."""
    Din = cfg.in_dim_numeric
    D = cfg.d_model
    H, dkv = cfg.n_heads, cfg.d_kv
    din_pad = -(-Din // 8) * 8
    in_w = jnp.zeros((din_pad, D), jnp.float32).at[:Din].set(params["in_w"])

    def per_head_qkv(lyr):
        wq = lyr["wq"].reshape(D, H, dkv)
        wk = lyr["wk"].reshape(D, H, dkv)
        wv = lyr["wv"].reshape(D, H, dkv)
        # (H, D, 3*d_kv): head-major so the kernel batches heads on the MXU
        return jnp.concatenate([wq, wk, wv], axis=-1).transpose(1, 0, 2)

    def per_head_wo(lyr):
        return lyr["wo"].reshape(H, dkv, D)   # (H, d_kv, D)

    return dict(
        in_w=in_w,
        in_b=params["in_b"],
        rel_bias=params["rel_bias"],
        final_ln=params["final_ln"],
        pool_q=params["pool_q"],
        ln1=jnp.stack([l["ln1"] for l in params["layers"]]),          # (NL,1,D)
        wqkv_h=jnp.stack([per_head_qkv(l) for l in params["layers"]]),# (NL,H,D,3*dkv)
        wo_h=jnp.stack([per_head_wo(l) for l in params["layers"]]),   # (NL,H,dkv,D)
        ln2=jnp.stack([l["ln2"] for l in params["layers"]]),          # (NL,1,D)
        wi=jnp.stack([l["wi"] for l in params["layers"]]),            # (NL,D,dff)
        wff=jnp.stack([l["wff"] for l in params["layers"]]),          # (NL,dff,D)
    )


# ---------------------------- pure-JAX reference -------------------------------

def forward_ref(cfg, params, x_num, mask):
    B, L, _ = x_num.shape
    H, dkv = cfg.n_heads, cfg.d_kv
    mask_f = mask.astype(jnp.float32)
    ext_mask = (1.0 - mask_f)[:, None, None, :] * NEG_INF
    pos_bias = compute_position_bias(cfg, params["rel_bias"], L)[None]
    h = x_num @ params["in_w"] + params["in_b"]
    for lyr in params["layers"]:
        xn = _rms(h, lyr["ln1"])
        q = (xn @ lyr["wq"]).reshape(B, L, H, dkv).transpose(0, 2, 1, 3)
        k = (xn @ lyr["wk"]).reshape(B, L, H, dkv).transpose(0, 2, 1, 3)
        v = (xn @ lyr["wv"]).reshape(B, L, H, dkv).transpose(0, 2, 1, 3)
        scores = jnp.einsum("bhqd,bhkd->bhqk", q, k) + pos_bias + ext_mask
        attn = jax.nn.softmax(scores, axis=-1)
        ctx = jnp.einsum("bhqk,bhkd->bhqd", attn, v)
        ctx = ctx.transpose(0, 2, 1, 3).reshape(B, L, H * dkv)
        h = h + ctx @ lyr["wo"]
        xn = _rms(h, lyr["ln2"])
        h = h + jnp.maximum(xn @ lyr["wi"], 0.0) @ lyr["wff"]
    h = _rms(h, params["final_ln"])
    logits = jnp.einsum("kd,bld->bkl", params["pool_q"], h)
    logits = jnp.where(mask_f[:, None, :] > 0.5, logits, -10000.0)
    attn = jax.nn.softmax(logits, axis=-1)
    return jnp.einsum("bkl,bld->bkd", attn, h)


# ------------------------------------ main -------------------------------------

if __name__ == "__main__":
    cfg = EyeT5Config()
    key = jax.random.PRNGKey(0)
    kp, kx = jax.random.split(key)
    params = init_params(cfg, kp)
    packed = pack_params(cfg, params)

    B, L = 2, 8
    x_num = jax.random.normal(kx, (B, L, cfg.in_dim_numeric), jnp.float32)
    lengths = jnp.array([8, 5])
    mask = jnp.arange(L)[None, :] < lengths[:, None]          # (B, L) bool

    # Precomputed ONCE outside the per-call path (depends only on rel_bias, L).
    pos_bias = compute_position_bias(cfg, packed["rel_bias"], L)   # (H, L, L)

    out = eye_encoder_t5_pallas(cfg, packed, pos_bias, x_num, mask)
    out = jax.block_until_ready(out)
    assert out.shape == (B, cfg.k_tokens, cfg.d_model)

    ref = forward_ref(cfg, params, x_num, mask)
    err = float(jnp.max(jnp.abs(out - ref)))
    if err < 1e-2:
        print("KERNEL_OK")
    else:
        print(f"MISMATCH max_abs_err={err}")
</pallas_src>

<mosaic_0001>
module attributes {stable_mosaic.version = 11 : i64} {
  func.func @_fused_kernel(%arg0: i32, %arg1: memref<16x8xf32, #tpu.memory_space<vmem>>, %arg2: memref<2x8xf32, #tpu.memory_space<vmem>>, %arg3: memref<4x8x8xf32, #tpu.memory_space<vmem>>, %arg4: memref<8x32xf32, #tpu.memory_space<vmem>>, %arg5: memref<1x32xf32, #tpu.memory_space<vmem>>, %arg6: memref<2x1x32xf32, #tpu.memory_space<vmem>>, %arg7: memref<2x4x32x24xf32, #tpu.memory_space<vmem>>, %arg8: memref<2x4x8x32xf32, #tpu.memory_space<vmem>>, %arg9: memref<2x1x32xf32, #tpu.memory_space<vmem>>, %arg10: memref<2x32x128xf32, #tpu.memory_space<vmem>>, %arg11: memref<2x128x32xf32, #tpu.memory_space<vmem>>, %arg12: memref<1x32xf32, #tpu.memory_space<vmem>>, %arg13: memref<3x32xf32, #tpu.memory_space<vmem>>, %arg14: memref<2x3x32xf32, #tpu.memory_space<vmem>>) attributes {dimension_semantics = [#tpu.dimension_semantics<arbitrary>], iteration_bounds = array<i64: 1>, scalar_prefetch = 0 : i64, scratch_operands = 0 : i64, tpu.core_type = #tpu.core_type<tc>, window_params = [{pipeline_mode = #tpu.pipeline_mode<synchronous>, transform_indices = @transform_0, window_bounds = array<i64: 16, 8>}, {pipeline_mode = #tpu.pipeline_mode<synchronous>, transform_indices = @transform_1, window_bounds = array<i64: 2, 8>}, {pipeline_mode = #tpu.pipeline_mode<synchronous>, transform_indices = @transform_2, window_bounds = array<i64: 4, 8, 8>}, {pipeline_mode = #tpu.pipeline_mode<synchronous>, transform_indices = @transform_3, window_bounds = array<i64: 8, 32>}, {pipeline_mode = #tpu.pipeline_mode<synchronous>, transform_indices = @transform_4, window_bounds = array<i64: 1, 32>}, {pipeline_mode = #tpu.pipeline_mode<synchronous>, transform_indices = @transform_5, window_bounds = array<i64: 2, 1, 32>}, {pipeline_mode = #tpu.pipeline_mode<synchronous>, transform_indices = @transform_6, window_bounds = array<i64: 2, 4, 32, 24>}, {pipeline_mode = #tpu.pipeline_mode<synchronous>, transform_indices = @transform_7, window_bounds = array<i64: 2, 4, 8, 32>}, {pipeline_mode = #tpu.pipeline_mode<synchronous>, transform_indices = @transform_8, window_bounds = array<i64: 2, 1, 32>}, {pipeline_mode = #tpu.pipeline_mode<synchronous>, transform_indices = @transform_9, window_bounds = array<i64: 2, 32, 128>}, {pipeline_mode = #tpu.pipeline_mode<synchronous>, transform_indices = @transform_10, window_bounds = array<i64: 2, 128, 32>}, {pipeline_mode = #tpu.pipeline_mode<synchronous>, transform_indices = @transform_11, window_bounds = array<i64: 1, 32>}, {pipeline_mode = #tpu.pipeline_mode<synchronous>, transform_indices = @transform_12, window_bounds = array<i64: 3, 32>}, {pipeline_mode = #tpu.pipeline_mode<synchronous>, transform_indices = @transform_13, window_bounds = array<i64: 2, 3, 32>}]} {
    %c0 = arith.constant 0 : index
    %c0_0 = arith.constant 0 : index
    %0 = vector.load %arg2[%c0, %c0_0] : memref<2x8xf32, #tpu.memory_space<vmem>>, vector<2x8xf32>
    %c0_1 = arith.constant 0 : index
    %c0_2 = arith.constant 0 : index
    %c0_3 = arith.constant 0 : index
    %1 = vector.load %arg3[%c0_1, %c0_2, %c0_3] : memref<4x8x8xf32, #tpu.memory_space<vmem>>, vector<4x8x8xf32>
    %2 = vector.shape_cast %1 : vector<4x8x8xf32> to vector<1x4x8x8xf32>
    %cst = arith.constant 1.000000e+00 : f32
    %3 = vector.broadcast %cst : f32 to vector<2x8xf32>
    %4 = arith.subf %3, %0 : vector<2x8xf32>
    %cst_4 = arith.constant -3.40282347E+38 : f32
    %5 = vector.broadcast %cst_4 : f32 to vector<2x8xf32>
    %6 = arith.mulf %4, %5 : vector<2x8xf32>
    %7 = vector.shape_cast %6 : vector<2x8xf32> to vector<2x1x1x8xf32>
    %8 = vector.broadcast %2 : vector<1x4x8x8xf32> to vector<2x4x8x8xf32>
    %9 = vector.broadcast %7 : vector<2x1x1x8xf32> to vector<2x4x8x8xf32>
    %10 = arith.addf %8, %9 : vector<2x4x8x8xf32>
    %11 = vector.shape_cast %10 : vector<2x4x8x8xf32> to vector<8x8x8xf32>
    %c0_5 = arith.constant 0 : index
    %c0_6 = arith.constant 0 : index
    %12 = vector.load %arg1[%c0_5, %c0_6] : memref<16x8xf32, #tpu.memory_space<vmem>>, vector<16x8xf32>
    %c0_7 = arith.constant 0 : index
    %c0_8 = arith.constant 0 : index
    %13 = vector.load %arg4[%c0_7, %c0_8] : memref<8x32xf32, #tpu.memory_space<vmem>>, vector<8x32xf32>
    %cst_9 = arith.constant dense<0.000000e+00> : vector<16x32xf32>
    %14 = tpu.matmul %12, %13, %cst_9 {dimension_numbers = #tpu.dot_dimension_numbers<[1], [0], [0], [1], [0, 0, 1, 1], [], []>} : vector<16x8xf32>, vector<8x32xf32>, vector<16x32xf32> -> vector<16x32xf32>
    %c0_10 = arith.constant 0 : index
    %c0_11 = arith.constant 0 : index
    %15 = vector.load %arg5[%c0_10, %c0_11] : memref<1x32xf32, #tpu.memory_space<vmem>>, vector<1x32xf32>
    %16 = vector.broadcast %15 : vector<1x32xf32> to vector<16x32xf32>
    %17 = arith.addf %14, %16 : vector<16x32xf32>
    %c0_12 = arith.constant 0 : index
    %c0_13 = arith.constant 0 : index
    %c0_14 = arith.constant 0 : index
    %18 = vector.load %arg6[%c0_12, %c0_13, %c0_14] : memref<2x1x32xf32, #tpu.memory_space<vmem>>, vector<1x1x32xf32>
    %19 = vector.shape_cast %18 : vector<1x1x32xf32> to vector<1x32xf32>
    %20 = arith.mulf %17, %17 : vector<16x32xf32>
    %cst_15 = arith.constant dense<0.000000e+00> : vector<16xf32>
    %21 = vector.multi_reduction <add>, %20, %cst_15 [1] : vector<16x32xf32> to vector<16xf32>
    %22 = vector.shape_cast %21 : vector<16xf32> to vector<16x1xf32>
    %cst_16 = arith.constant 3.200000e+01 : f32
    %23 = vector.broadcast %cst_16 : f32 to vector<16x1xf32>
    %24 = arith.divf %22, %23 : vector<16x1xf32>
    %cst_17 = arith.constant 9.99999997E-7 : f32
    %25 = vector.broadcast %cst_17 : f32 to vector<16x1xf32>
    %26 = arith.addf %24, %25 : vector<16x1xf32>
    %27 = math.rsqrt %26 : vector<16x1xf32>
    %28 = vector.broadcast %27 : vector<16x1xf32> to vector<16x32xf32>
    %29 = arith.mulf %17, %28 : vector<16x32xf32>
    %30 = vector.broadcast %19 : vector<1x32xf32> to vector<16x32xf32>
    %31 = arith.mulf %29, %30 : vector<16x32xf32>
    %32 = vector.shape_cast %31 : vector<16x32xf32> to vector<2x1x8x32xf32>
    %33 = vector.shape_cast %32 : vector<2x1x8x32xf32> to vector<2x1x8x32xf32>
    %34 = vector.broadcast %33 : vector<2x1x8x32xf32> to vector<2x4x8x32xf32>
    %35 = vector.shape_cast %34 : vector<2x4x8x32xf32> to vector<8x8x32xf32>
    %c0_18 = arith.constant 0 : index
    %c0_19 = arith.constant 0 : index
    %c0_20 = arith.constant 0 : index
    %c0_21 = arith.constant 0 : index
    %36 = vector.load %arg7[%c0_18, %c0_19, %c0_20, %c0_21] : memref<2x4x32x24xf32, #tpu.memory_space<vmem>>, vector<1x4x32x24xf32>
    %37 = vector.shape_cast %36 : vector<1x4x32x24xf32> to vector<4x32x24xf32>
    %38 = vector.shape_cast %37 : vector<4x32x24xf32> to vector<1x4x32x24xf32>
    %39 = vector.shape_cast %38 : vector<1x4x32x24xf32> to vector<1x4x32x24xf32>
    %40 = vector.broadcast %39 : vector<1x4x32x24xf32> to vector<2x4x32x24xf32>
    %41 = vector.shape_cast %40 : vector<2x4x32x24xf32> to vector<8x32x24xf32>
    "tpu.trace_start"() <{level = 10 : i32, message = "gld,gde->gle"}> : () -> ()
    %cst_22 = arith.constant dense<0.000000e+00> : vector<8x8x24xf32>
    %42 = tpu.matmul %35, %41, %cst_22 {dimension_numbers = #tpu.dot_dimension_numbers<[2], [1], [1], [2], [0, 0, 0, 1, 1, 2], [0], [0]>} : vector<8x8x32xf32>, vector<8x32x24xf32>, vector<8x8x24xf32> -> vector<8x8x24xf32>
    "tpu.trace_stop"() : () -> ()
    %43 = vector.extract_strided_slice %42 {offsets = [0, 0, 0], sizes = [8, 8, 8], strides = [1, 1, 1]} : vector<8x8x24xf32> to vector<8x8x8xf32>
    %44 = vector.extract_strided_slice %42 {offsets = [0, 0, 8], sizes = [8, 8, 8], strides = [1, 1, 1]} : vector<8x8x24xf32> to vector<8x8x8xf32>
    %45 = vector.extract_strided_slice %42 {offsets = [0, 0, 16], sizes = [8, 8, 8], strides = [1, 1, 1]} : vector<8x8x24xf32> to vector<8x8x8xf32>
    "tpu.trace_start"() <{level = 10 : i32, message = "gqd,gkd->gqk"}> : () -> ()
    %cst_23 = arith.constant dense<0.000000e+00> : vector<8x8x8xf32>
    %46 = tpu.matmul %43, %44, %cst_23 {dimension_numbers = #tpu.dot_dimension_numbers<[2], [2], [1], [1], [0, 0, 0, 1, 1, 1], [0], [0]>} : vector<8x8x8xf32>, vector<8x8x8xf32>, vector<8x8x8xf32> -> vector<8x8x8xf32>
    "tpu.trace_stop"() : () -> ()
    %47 = arith.addf %46, %11 : vector<8x8x8xf32>
    %cst_24 = arith.constant dense<0xFF800000> : vector<8x8xf32>
    %48 = vector.multi_reduction <maximumf>, %47, %cst_24 [2] : vector<8x8x8xf32> to vector<8x8xf32>
    %49 = vector.shape_cast %48 : vector<8x8xf32> to vector<8x8x1xf32>
    %50 = vector.broadcast %49 : vector<8x8x1xf32> to vector<8x8x8xf32>
    %51 = arith.subf %47, %50 : vector<8x8x8xf32>
    %52 = math.exp %51 : vector<8x8x8xf32>
    %cst_25 = arith.constant dense<0.000000e+00> : vector<8x8xf32>
    %53 = vector.multi_reduction <add>, %52, %cst_25 [2] : vector<8x8x8xf32> to vector<8x8xf32>
    %54 = vector.shape_cast %53 : vector<8x8xf32> to vector<8x8x1xf32>
    %55 = tpu.reciprocal %54 {approx = true} : vector<8x8x1xf32> -> vector<8x8x1xf32>
    %56 = vector.broadcast %55 : vector<8x8x1xf32> to vector<8x8x8xf32>
    %57 = arith.mulf %52, %56 : vector<8x8x8xf32>
    "tpu.trace_start"() <{level = 10 : i32, message = "gqk,gkd->gqd"}> : () -> ()
    %cst_26 = arith.constant dense<0.000000e+00> : vector<8x8x8xf32>
    %58 = tpu.matmul %57, %45, %cst_26 {dimension_numbers = #tpu.dot_dimension_numbers<[2], [1], [1], [2], [0, 0, 0, 1, 1, 2], [0], [0]>} : vector<8x8x8xf32>, vector<8x8x8xf32>, vector<8x8x8xf32> -> vector<8x8x8xf32>
    "tpu.trace_stop"() : () -> ()
    %c0_27 = arith.constant 0 : index
    %c0_28 = arith.constant 0 : index
    %c0_29 = arith.constant 0 : index
    %c0_30 = arith.constant 0 : index
    %59 = vector.load %arg8[%c0_27, %c0_28, %c0_29, %c0_30] : memref<2x4x8x32xf32, #tpu.memory_space<vmem>>, vector<1x4x8x32xf32>
    %60 = vector.shape_cast %59 : vector<1x4x8x32xf32> to vector<4x8x32xf32>
    %61 = vector.shape_cast %60 : vector<4x8x32xf32> to vector<1x4x8x32xf32>
    %62 = vector.shape_cast %61 : vector<1x4x8x32xf32> to vector<1x4x8x32xf32>
    %63 = vector.broadcast %62 : vector<1x4x8x32xf32> to vector<2x4x8x32xf32>
    %64 = vector.shape_cast %63 : vector<2x4x8x32xf32> to vector<8x8x32xf32>
    "tpu.trace_start"() <{level = 10 : i32, message = "gqd,gde->gqe"}> : () -> ()
    %cst_31 = arith.constant dense<0.000000e+00> : vector<8x8x32xf32>
    %65 = tpu.matmul %58, %64, %cst_31 {dimension_numbers = #tpu.dot_dimension_numbers<[2], [1], [1], [2], [0, 0, 0, 1, 1, 2], [0], [0]>} : vector<8x8x8xf32>, vector<8x8x32xf32>, vector<8x8x32xf32> -> vector<8x8x32xf32>
    "tpu.trace_stop"() : () -> ()
    %66 = vector.shape_cast %65 : vector<8x8x32xf32> to vector<2x4x8x32xf32>
    %cst_32 = arith.constant dense<0.000000e+00> : vector<2x8x32xf32>
    %67 = vector.multi_reduction <add>, %66, %cst_32 [1] : vector<2x4x8x32xf32> to vector<2x8x32xf32>
    %68 = vector.shape_cast %67 : vector<2x8x32xf32> to vector<16x32xf32>
    %69 = arith.addf %17, %68 : vector<16x32xf32>
    %c0_33 = arith.constant 0 : index
    %c0_34 = arith.constant 0 : index
    %c0_35 = arith.constant 0 : index
    %70 = vector.load %arg9[%c0_33, %c0_34, %c0_35] : memref<2x1x32xf32, #tpu.memory_space<vmem>>, vector<1x1x32xf32>
    %71 = vector.shape_cast %70 : vector<1x1x32xf32> to vector<1x32xf32>
    %72 = arith.mulf %69, %69 : vector<16x32xf32>
    %cst_36 = arith.constant dense<0.000000e+00> : vector<16xf32>
    %73 = vector.multi_reduction <add>, %72, %cst_36 [1] : vector<16x32xf32> to vector<16xf32>
    %74 = vector.shape_cast %73 : vector<16xf32> to vector<16x1xf32>
    %cst_37 = arith.constant 3.200000e+01 : f32
    %75 = vector.broadcast %cst_37 : f32 to vector<16x1xf32>
    %76 = arith.divf %74, %75 : vector<16x1xf32>
    %cst_38 = arith.constant 9.99999997E-7 : f32
    %77 = vector.broadcast %cst_38 : f32 to vector<16x1xf32>
    %78 = arith.addf %76, %77 : vector<16x1xf32>
    %79 = math.rsqrt %78 : vector<16x1xf32>
    %80 = vector.broadcast %79 : vector<16x1xf32> to vector<16x32xf32>
    %81 = arith.mulf %69, %80 : vector<16x32xf32>
    %82 = vector.broadcast %71 : vector<1x32xf32> to vector<16x32xf32>
    %83 = arith.mulf %81, %82 : vector<16x32xf32>
    %c0_39 = arith.constant 0 : index
    %c0_40 = arith.constant 0 : index
    %c0_41 = arith.constant 0 : index
    %84 = vector.load %arg10[%c0_39, %c0_40, %c0_41] : memref<2x32x128xf32, #tpu.memory_space<vmem>>, vector<1x32x128xf32>
    %85 = vector.shape_cast %84 : vector<1x32x128xf32> to vector<32x128xf32>
    %cst_42 = arith.constant dense<0.000000e+00> : vector<16x128xf32>
    %86 = tpu.matmul %83, %85, %cst_42 {dimension_numbers = #tpu.dot_dimension_numbers<[1], [0], [0], [1], [0, 0, 1, 1], [], []>} : vector<16x32xf32>, vector<32x128xf32>, vector<16x128xf32> -> vector<16x128xf32>
    %cst_43 = arith.constant 0.000000e+00 : f32
    %87 = vector.broadcast %cst_43 : f32 to vector<16x128xf32>
    %88 = arith.maximumf %86, %87 : vector<16x128xf32>
    %c0_44 = arith.constant 0 : index
    %c0_45 = arith.constant 0 : index
    %c0_46 = arith.constant 0 : index
    %89 = vector.load %arg11[%c0_44, %c0_45, %c0_46] : memref<2x128x32xf32, #tpu.memory_space<vmem>>, vector<1x128x32xf32>
    %90 = vector.shape_cast %89 : vector<1x128x32xf32> to vector<128x32xf32>
    %cst_47 = arith.constant dense<0.000000e+00> : vector<16x32xf32>
    %91 = tpu.matmul %88, %90, %cst_47 {dimension_numbers = #tpu.dot_dimension_numbers<[1], [0], [0], [1], [0, 0, 1, 1], [], []>} : vector<16x128xf32>, vector<128x32xf32>, vector<16x32xf32> -> vector<16x32xf32>
    %92 = arith.addf %69, %91 : vector<16x32xf32>
    %c1 = arith.constant 1 : index
    %c0_48 = arith.constant 0 : index
    %c0_49 = arith.constant 0 : index
    %93 = vector.load %arg6[%c1, %c0_48, %c0_49] : memref<2x1x32xf32, #tpu.memory_space<vmem>>, vector<1x1x32xf32>
    %94 = vector.shape_cast %93 : vector<1x1x32xf32> to vector<1x32xf32>
    %95 = arith.mulf %92, %92 : vector<16x32xf32>
    %cst_50 = arith.constant dense<0.000000e+00> : vector<16xf32>
    %96 = vector.multi_reduction <add>, %95, %cst_50 [1] : vector<16x32xf32> to vector<16xf32>
    %97 = vector.shape_cast %96 : vector<16xf32> to vector<16x1xf32>
    %cst_51 = arith.constant 3.200000e+01 : f32
    %98 = vector.broadcast %cst_51 : f32 to vector<16x1xf32>
    %99 = arith.divf %97, %98 : vector<16x1xf32>
    %cst_52 = arith.constant 9.99999997E-7 : f32
    %100 = vector.broadcast %cst_52 : f32 to vector<16x1xf32>
    %101 = arith.addf %99, %100 : vector<16x1xf32>
    %102 = math.rsqrt %101 : vector<16x1xf32>
    %103 = vector.broadcast %102 : vector<16x1xf32> to vector<16x32xf32>
    %104 = arith.mulf %92, %103 : vector<16x32xf32>
    %105 = vector.broadcast %94 : vector<1x32xf32> to vector<16x32xf32>
    %106 = arith.mulf %104, %105 : vector<16x32xf32>
    %107 = vector.shape_cast %106 : vector<16x32xf32> to vector<2x1x8x32xf32>
    %108 = vector.shape_cast %107 : vector<2x1x8x32xf32> to vector<2x1x8x32xf32>
    %109 = vector.broadcast %108 : vector<2x1x8x32xf32> to vector<2x4x8x32xf32>
    %110 = vector.shape_cast %109 : vector<2x4x8x32xf32> to vector<8x8x32xf32>
    %c1_53 = arith.constant 1 : index
    %c0_54 = arith.constant 0 : index
    %c0_55 = arith.constant 0 : index
    %c0_56 = arith.constant 0 : index
    %111 = vector.load %arg7[%c1_53, %c0_54, %c0_55, %c0_56] : memref<2x4x32x24xf32, #tpu.memory_space<vmem>>, vector<1x4x32x24xf32>
    %112 = vector.shape_cast %111 : vector<1x4x32x24xf32> to vector<4x32x24xf32>
    %113 = vector.shape_cast %112 : vector<4x32x24xf32> to vector<1x4x32x24xf32>
    %114 = vector.shape_cast %113 : vector<1x4x32x24xf32> to vector<1x4x32x24xf32>
    %115 = vector.broadcast %114 : vector<1x4x32x24xf32> to vector<2x4x32x24xf32>
    %116 = vector.shape_cast %115 : vector<2x4x32x24xf32> to vector<8x32x24xf32>
    "tpu.trace_start"() <{level = 10 : i32, message = "gld,gde->gle"}> : () -> ()
    %cst_57 = arith.constant dense<0.000000e+00> : vector<8x8x24xf32>
    %117 = tpu.matmul %110, %116, %cst_57 {dimension_numbers = #tpu.dot_dimension_numbers<[2], [1], [1], [2], [0, 0, 0, 1, 1, 2], [0], [0]>} : vector<8x8x32xf32>, vector<8x32x24xf32>, vector<8x8x24xf32> -> vector<8x8x24xf32>
    "tpu.trace_stop"() : () -> ()
    %118 = vector.extract_strided_slice %117 {offsets = [0, 0, 0], sizes = [8, 8, 8], strides = [1, 1, 1]} : vector<8x8x24xf32> to vector<8x8x8xf32>
    %119 = vector.extract_strided_slice %117 {offsets = [0, 0, 8], sizes = [8, 8, 8], strides = [1, 1, 1]} : vector<8x8x24xf32> to vector<8x8x8xf32>
    %120 = vector.extract_strided_slice %117 {offsets = [0, 0, 16], sizes = [8, 8, 8], strides = [1, 1, 1]} : vector<8x8x24xf32> to vector<8x8x8xf32>
    "tpu.trace_start"() <{level = 10 : i32, message = "gqd,gkd->gqk"}> : () -> ()
    %cst_58 = arith.constant dense<0.000000e+00> : vector<8x8x8xf32>
    %121 = tpu.matmul %118, %119, %cst_58 {dimension_numbers = #tpu.dot_dimension_numbers<[2], [2], [1], [1], [0, 0, 0, 1, 1, 1], [0], [0]>} : vector<8x8x8xf32>, vector<8x8x8xf32>, vector<8x8x8xf32> -> vector<8x8x8xf32>
    "tpu.trace_stop"() : () -> ()
    %122 = arith.addf %121, %11 : vector<8x8x8xf32>
    %cst_59 = arith.constant dense<0xFF800000> : vector<8x8xf32>
    %123 = vector.multi_reduction <maximumf>, %122, %cst_59 [2] : vector<8x8x8xf32> to vector<8x8xf32>
    %124 = vector.shape_cast %123 : vector<8x8xf32> to vector<8x8x1xf32>
    %125 = vector.broadcast %124 : vector<8x8x1xf32> to vector<8x8x8xf32>
    %126 = arith.subf %122, %125 : vector<8x8x8xf32>
    %127 = math.exp %126 : vector<8x8x8xf32>
    %cst_60 = arith.constant dense<0.000000e+00> : vector<8x8xf32>
    %128 = vector.multi_reduction <add>, %127, %cst_60 [2] : vector<8x8x8xf32> to vector<8x8xf32>
    %129 = vector.shape_cast %128 : vector<8x8xf32> to vector<8x8x1xf32>
    %130 = tpu.reciprocal %129 {approx = true} : vector<8x8x1xf32> -> vector<8x8x1xf32>
    %131 = vector.broadcast %130 : vector<8x8x1xf32> to vector<8x8x8xf32>
    %132 = arith.mulf %127, %131 : vector<8x8x8xf32>
    "tpu.trace_start"() <{level = 10 : i32, message = "gqk,gkd->gqd"}> : () -> ()
    %cst_61 = arith.constant dense<0.000000e+00> : vector<8x8x8xf32>
    %133 = tpu.matmul %132, %120, %cst_61 {dimension_numbers = #tpu.dot_dimension_numbers<[2], [1], [1], [2], [0, 0, 0, 1, 1, 2], [0], [0]>} : vector<8x8x8xf32>, vector<8x8x8xf32>, vector<8x8x8xf32> -> vector<8x8x8xf32>
    "tpu.trace_stop"() : () -> ()
    %c1_62 = arith.constant 1 : index
    %c0_63 = arith.constant 0 : index
    %c0_64 = arith.constant 0 : index
    %c0_65 = arith.constant 0 : index
    %134 = vector.load %arg8[%c1_62, %c0_63, %c0_64, %c0_65] : memref<2x4x8x32xf32, #tpu.memory_space<vmem>>, vector<1x4x8x32xf32>
    %135 = vector.shape_cast %134 : vector<1x4x8x32xf32> to vector<4x8x32xf32>
    %136 = vector.shape_cast %135 : vector<4x8x32xf32> to vector<1x4x8x32xf32>
    %137 = vector.shape_cast %136 : vector<1x4x8x32xf32> to vector<1x4x8x32xf32>
    %138 = vector.broadcast %137 : vector<1x4x8x32xf32> to vector<2x4x8x32xf32>
    %139 = vector.shape_cast %138 : vector<2x4x8x32xf32> to vector<8x8x32xf32>
    "tpu.trace_start"() <{level = 10 : i32, message = "gqd,gde->gqe"}> : () -> ()
    %cst_66 = arith.constant dense<0.000000e+00> : vector<8x8x32xf32>
    %140 = tpu.matmul %133, %139, %cst_66 {dimension_numbers = #tpu.dot_dimension_numbers<[2], [1], [1], [2], [0, 0, 0, 1, 1, 2], [0], [0]>} : vector<8x8x8xf32>, vector<8x8x32xf32>, vector<8x8x32xf32> -> vector<8x8x32xf32>
    "tpu.trace_stop"() : () -> ()
    %141 = vector.shape_cast %140 : vector<8x8x32xf32> to vector<2x4x8x32xf32>
    %cst_67 = arith.constant dense<0.000000e+00> : vector<2x8x32xf32>
    %142 = vector.multi_reduction <add>, %141, %cst_67 [1] : vector<2x4x8x32xf32> to vector<2x8x32xf32>
    %143 = vector.shape_cast %142 : vector<2x8x32xf32> to vector<16x32xf32>
    %144 = arith.addf %92, %143 : vector<16x32xf32>
    %c1_68 = arith.constant 1 : index
    %c0_69 = arith.constant 0 : index
    %c0_70 = arith.constant 0 : index
    %145 = vector.load %arg9[%c1_68, %c0_69, %c0_70] : memref<2x1x32xf32, #tpu.memory_space<vmem>>, vector<1x1x32xf32>
    %146 = vector.shape_cast %145 : vector<1x1x32xf32> to vector<1x32xf32>
    %147 = arith.mulf %144, %144 : vector<16x32xf32>
    %cst_71 = arith.constant dense<0.000000e+00> : vector<16xf32>
    %148 = vector.multi_reduction <add>, %147, %cst_71 [1] : vector<16x32xf32> to vector<16xf32>
    %149 = vector.shape_cast %148 : vector<16xf32> to vector<16x1xf32>
    %cst_72 = arith.constant 3.200000e+01 : f32
    %150 = vector.broadcast %cst_72 : f32 to vector<16x1xf32>
    %151 = arith.divf %149, %150 : vector<16x1xf32>
    %cst_73 = arith.constant 9.99999997E-7 : f32
    %152 = vector.broadcast %cst_73 : f32 to vector<16x1xf32>
    %153 = arith.addf %151, %152 : vector<16x1xf32>
    %154 = math.rsqrt %153 : vector<16x1xf32>
    %155 = vector.broadcast %154 : vector<16x1xf32> to vector<16x32xf32>
    %156 = arith.mulf %144, %155 : vector<16x32xf32>
    %157 = vector.broadcast %146 : vector<1x32xf32> to vector<16x32xf32>
    %158 = arith.mulf %156, %157 : vector<16x32xf32>
    %c1_74 = arith.constant 1 : index
    %c0_75 = arith.constant 0 : index
    %c0_76 = arith.constant 0 : index
    %159 = vector.load %arg10[%c1_74, %c0_75, %c0_76] : memref<2x32x128xf32, #tpu.memory_space<vmem>>, vector<1x32x128xf32>
    %160 = vector.shape_cast %159 : vector<1x32x128xf32> to vector<32x128xf32>
    %cst_77 = arith.constant dense<0.000000e+00> : vector<16x128xf32>
    %161 = tpu.matmul %158, %160, %cst_77 {dimension_numbers = #tpu.dot_dimension_numbers<[1], [0], [0], [1], [0, 0, 1, 1], [], []>} : vector<16x32xf32>, vector<32x128xf32>, vector<16x128xf32> -> vector<16x128xf32>
    %cst_78 = arith.constant 0.000000e+00 : f32
    %162 = vector.broadcast %cst_78 : f32 to vector<16x128xf32>
    %163 = arith.maximumf %161, %162 : vector<16x128xf32>
    %c1_79 = arith.constant 1 : index
    %c0_80 = arith.constant 0 : index
    %c0_81 = arith.constant 0 : index
    %164 = vector.load %arg11[%c1_79, %c0_80, %c0_81] : memref<2x128x32xf32, #tpu.memory_space<vmem>>, vector<1x128x32xf32>
    %165 = vector.shape_cast %164 : vector<1x128x32xf32> to vector<128x32xf32>
    %cst_82 = arith.constant dense<0.000000e+00> : vector<16x32xf32>
    %166 = tpu.matmul %163, %165, %cst_82 {dimension_numbers = #tpu.dot_dimension_numbers<[1], [0], [0], [1], [0, 0, 1, 1], [], []>} : vector<16x128xf32>, vector<128x32xf32>, vector<16x32xf32> -> vector<16x32xf32>
    %167 = arith.addf %144, %166 : vector<16x32xf32>
    %c0_83 = arith.constant 0 : index
    %c0_84 = arith.constant 0 : index
    %168 = vector.load %arg12[%c0_83, %c0_84] : memref<1x32xf32, #tpu.memory_space<vmem>>, vector<1x32xf32>
    %169 = arith.mulf %167, %167 : vector<16x32xf32>
    %cst_85 = arith.constant dense<0.000000e+00> : vector<16xf32>
    %170 = vector.multi_reduction <add>, %169, %cst_85 [1] : vector<16x32xf32> to vector<16xf32>
    %171 = vector.shape_cast %170 : vector<16xf32> to vector<16x1xf32>
    %cst_86 = arith.constant 3.200000e+01 : f32
    %172 = vector.broadcast %cst_86 : f32 to vector<16x1xf32>
    %173 = arith.divf %171, %172 : vector<16x1xf32>
    %cst_87 = arith.constant 9.99999997E-7 : f32
    %174 = vector.broadcast %cst_87 : f32 to vector<16x1xf32>
    %175 = arith.addf %173, %174 : vector<16x1xf32>
    %176 = math.rsqrt %175 : vector<16x1xf32>
    %177 = vector.broadcast %176 : vector<16x1xf32> to vector<16x32xf32>
    %178 = arith.mulf %167, %177 : vector<16x32xf32>
    %179 = vector.broadcast %168 : vector<1x32xf32> to vector<16x32xf32>
    %180 = arith.mulf %178, %179 : vector<16x32xf32>
    %181 = vector.shape_cast %180 : vector<16x32xf32> to vector<2x8x32xf32>
    %c0_88 = arith.constant 0 : index
    %c0_89 = arith.constant 0 : index
    %182 = vector.load %arg13[%c0_88, %c0_89] : memref<3x32xf32, #tpu.memory_space<vmem>>, vector<3x32xf32>
    %183 = vector.shape_cast %182 : vector<3x32xf32> to vector<1x3x32xf32>
    %184 = vector.shape_cast %183 : vector<1x3x32xf32> to vector<1x3x32xf32>
    %185 = vector.broadcast %184 : vector<1x3x32xf32> to vector<2x3x32xf32>
    "tpu.trace_start"() <{level = 10 : i32, message = "bkd,bld->bkl"}> : () -> ()
    %cst_90 = arith.constant dense<0.000000e+00> : vector<2x3x8xf32>
    %186 = tpu.matmul %185, %181, %cst_90 {dimension_numbers = #tpu.dot_dimension_numbers<[2], [2], [1], [1], [0, 0, 0, 1, 1, 1], [0], [0]>} : vector<2x3x32xf32>, vector<2x8x32xf32>, vector<2x3x8xf32> -> vector<2x3x8xf32>
    "tpu.trace_stop"() : () -> ()
    %187 = vector.shape_cast %0 : vector<2x8xf32> to vector<2x1x8xf32>
    %cst_91 = arith.constant 5.000000e-01 : f32
    %188 = vector.broadcast %cst_91 : f32 to vector<2x1x8xf32>
    %189 = arith.cmpf ogt, %187, %188 : vector<2x1x8xf32>
    %cst_92 = arith.constant -1.000000e+04 : f32
    %190 = vector.shape_cast %189 : vector<2x1x8xi1> to vector<2x1x8xi1>
    %191 = vector.broadcast %190 : vector<2x1x8xi1> to vector<2x3x8xi1>
    %192 = vector.broadcast %cst_92 : f32 to vector<2x3x8xf32>
    %193 = arith.select %191, %186, %192 : vector<2x3x8xi1>, vector<2x3x8xf32>
    %cst_93 = arith.constant dense<0xFF800000> : vector<2x3xf32>
    %194 = vector.multi_reduction <maximumf>, %193, %cst_93 [2] : vector<2x3x8xf32> to vector<2x3xf32>
    %195 = vector.shape_cast %194 : vector<2x3xf32> to vector<2x3x1xf32>
    %196 = vector.broadcast %195 : vector<2x3x1xf32> to vector<2x3x8xf32>
    %197 = arith.subf %193, %196 : vector<2x3x8xf32>
    %198 = math.exp %197 : vector<2x3x8xf32>
    %cst_94 = arith.constant dense<0.000000e+00> : vector<2x3xf32>
    %199 = vector.multi_reduction <add>, %198, %cst_94 [2] : vector<2x3x8xf32> to vector<2x3xf32>
    %200 = vector.shape_cast %199 : vector<2x3xf32> to vector<2x3x1xf32>
    %201 = tpu.reciprocal %200 {approx = true} : vector<2x3x1xf32> -> vector<2x3x1xf32>
    %202 = vector.broadcast %201 : vector<2x3x1xf32> to vector<2x3x8xf32>
    %203 = arith.mulf %198, %202 : vector<2x3x8xf32>
    "tpu.trace_start"() <{level = 10 : i32, message = "bkl,bld->bkd"}> : () -> ()
    %cst_95 = arith.constant dense<0.000000e+00> : vector<2x3x32xf32>
    %204 = tpu.matmul %203, %181, %cst_95 {dimension_numbers = #tpu.dot_dimension_numbers<[2], [1], [1], [2], [0, 0, 0, 1, 1, 2], [0], [0]>} : vector<2x3x8xf32>, vector<2x8x32xf32>, vector<2x3x32xf32> -> vector<2x3x32xf32>
    "tpu.trace_stop"() : () -> ()
    %c0_96 = arith.constant 0 : index
    %c0_97 = arith.constant 0 : index
    %c0_98 = arith.constant 0 : index
    %205 = vector.load %arg14[%c0_96, %c0_97, %c0_98] : memref<2x3x32xf32, #tpu.memory_space<vmem>>, vector<2x3x32xf32>
    tpu.vector_store %arg14[%c0_96, %c0_97, %c0_98], %204 {strides = array<i32>} : memref<2x3x32xf32, #tpu.memory_space<vmem>>, vector<2x3x32xf32>,
    return
  }
  func.func @transform_0(%arg0: i32) -> (i32, i32) {
    %c0_i32 = arith.constant 0 : i32
    %c0_i32_0 = arith.constant 0 : i32
    %c0_i32_1 = arith.constant 0 : i32
    return %c0_i32, %c0_i32_0 : i32, i32
  }
  func.func @transform_1(%arg0: i32) -> (i32, i32) {
    %c0_i32 = arith.constant 0 : i32
    %c0_i32_0 = arith.constant 0 : i32
    %c0_i32_1 = arith.constant 0 : i32
    return %c0_i32, %c0_i32_0 : i32, i32
  }
  func.func @transform_2(%arg0: i32) -> (i32, i32, i32) {
    %c0_i32 = arith.constant 0 : i32
    %c0_i32_0 = arith.constant 0 : i32
    %c0_i32_1 = arith.constant 0 : i32
    %c0_i32_2 = arith.constant 0 : i32
    return %c0_i32, %c0_i32_0, %c0_i32_1 : i32, i32, i32
  }
  func.func @transform_3(%arg0: i32) -> (i32, i32) {
    %c0_i32 = arith.constant 0 : i32
    %c0_i32_0 = arith.constant 0 : i32
    %c0_i32_1 = arith.constant 0 : i32
    return %c0_i32, %c0_i32_0 : i32, i32
  }
  func.func @transform_4(%arg0: i32) -> (i32, i32) {
    %c0_i32 = arith.constant 0 : i32
    %c0_i32_0 = arith.constant 0 : i32
    %c0_i32_1 = arith.constant 0 : i32
    return %c0_i32, %c0_i32_0 : i32, i32
  }
  func.func @transform_5(%arg0: i32) -> (i32, i32, i32) {
    %c0_i32 = arith.constant 0 : i32
    %c0_i32_0 = arith.constant 0 : i32
    %c0_i32_1 = arith.constant 0 : i32
    %c0_i32_2 = arith.constant 0 : i32
    return %c0_i32, %c0_i32_0, %c0_i32_1 : i32, i32, i32
  }
  func.func @transform_6(%arg0: i32) -> (i32, i32, i32, i32) {
    %c0_i32 = arith.constant 0 : i32
    %c0_i32_0 = arith.constant 0 : i32
    %c0_i32_1 = arith.constant 0 : i32
    %c0_i32_2 = arith.constant 0 : i32
    %c0_i32_3 = arith.constant 0 : i32
    return %c0_i32, %c0_i32_0, %c0_i32_1, %c0_i32_2 : i32, i32, i32, i32
  }
  func.func @transform_7(%arg0: i32) -> (i32, i32, i32, i32) {
    %c0_i32 = arith.constant 0 : i32
    %c0_i32_0 = arith.constant 0 : i32
    %c0_i32_1 = arith.constant 0 : i32
    %c0_i32_2 = arith.constant 0 : i32
    %c0_i32_3 = arith.constant 0 : i32
    return %c0_i32, %c0_i32_0, %c0_i32_1, %c0_i32_2 : i32, i32, i32, i32
  }
  func.func @transform_8(%arg0: i32) -> (i32, i32, i32) {
    %c0_i32 = arith.constant 0 : i32
    %c0_i32_0 = arith.constant 0 : i32
    %c0_i32_1 = arith.constant 0 : i32
    %c0_i32_2 = arith.constant 0 : i32
    return %c0_i32, %c0_i32_0, %c0_i32_1 : i32, i32, i32
  }
  func.func @transform_9(%arg0: i32) -> (i32, i32, i32) {
    %c0_i32 = arith.constant 0 : i32
    %c0_i32_0 = arith.constant 0 : i32
    %c0_i32_1 = arith.constant 0 : i32
    %c0_i32_2 = arith.constant 0 : i32
    return %c0_i32, %c0_i32_0, %c0_i32_1 : i32, i32, i32
  }
  func.func @transform_10(%arg0: i32) -> (i32, i32, i32) {
    %c0_i32 = arith.constant 0 : i32
    %c0_i32_0 = arith.constant 0 : i32
    %c0_i32_1 = arith.constant 0 : i32
    %c0_i32_2 = arith.constant 0 : i32
    return %c0_i32, %c0_i32_0, %c0_i32_1 : i32, i32, i32
  }
  func.func @transform_11(%arg0: i32) -> (i32, i32) {
    %c0_i32 = arith.constant 0 : i32
    %c0_i32_0 = arith.constant 0 : i32
    %c0_i32_1 = arith.constant 0 : i32
    return %c0_i32, %c0_i32_0 : i32, i32
  }
  func.func @transform_12(%arg0: i32) -> (i32, i32) {
    %c0_i32 = arith.constant 0 : i32
    %c0_i32_0 = arith.constant 0 : i32
    %c0_i32_1 = arith.constant 0 : i32
    return %c0_i32, %c0_i32_0 : i32, i32
  }
  func.func @transform_13(%arg0: i32) -> (i32, i32, i32) {
    %c0_i32 = arith.constant 0 : i32
    %c0_i32_0 = arith.constant 0 : i32
    %c0_i32_1 = arith.constant 0 : i32
    %c0_i32_2 = arith.constant 0 : i32
    return %c0_i32, %c0_i32_0, %c0_i32_1 : i32, i32, i32
  }
}

</mosaic_0001>

<llo_original>
// kernel: tpu_custom_call.1
$region0: #{tpu_custom_call.1}
  #allocation0 [shape = 'u32[]', space=smem, size = 0x4, offset = 0x4, fixed_abs, tag = 'smem constant byte address 0x4 - core index']
  #allocation1 [shape = 'u32[72,128]{1,0:T(1,128)}', space=vmem, size = 0x9000, scoped, tag = 'internal scratch']
  %s0 = inlined_call_operand.vmem [shape: f32[16,8], index: 0, kind: input, shape index: {}]
  %s1 = inlined_call_operand.vmem [shape: f32[2,8], index: 1, kind: input, shape index: {}]
  %s2 = inlined_call_operand.vmem [shape: f32[4,8,8], index: 2, kind: input, shape index: {}]
  %s3 = inlined_call_operand.vmem [shape: f32[8,32], index: 3, kind: input, shape index: {}]
  %s4 = inlined_call_operand.vmem [shape: f32[1,32], index: 4, kind: input, shape index: {}]
  %s5 = inlined_call_operand.vmem [shape: f32[2,1,32], index: 5, kind: input, shape index: {}]
  %s6 = inlined_call_operand.vmem [shape: f32[2,4,32,24], index: 6, kind: input, shape index: {}]
  %s7 = inlined_call_operand.vmem [shape: f32[2,4,8,32], index: 7, kind: input, shape index: {}]
  %s8 = inlined_call_operand.vmem [shape: f32[2,1,32], index: 8, kind: input, shape index: {}]
  %s9 = inlined_call_operand.vmem [shape: f32[2,32,128], index: 9, kind: input, shape index: {}]
  %s10 = inlined_call_operand.vmem [shape: f32[2,128,32], index: 10, kind: input, shape index: {}]
  %s11 = inlined_call_operand.vmem [shape: f32[1,32], index: 11, kind: input, shape index: {}]
  %s12 = inlined_call_operand.vmem [shape: f32[3,32], index: 12, kind: input, shape index: {}]
  %s13 = inlined_call_operand.vmem [shape: f32[2,3,32], index: 13, kind: output, shape index: {}]
  %s14 = sld [smem:[#allocation0]]
  $region62: #{tpu_custom_call.1} parent=0
    _
  %s16 = ssub.s32 1, %s14
  %s17 = scalar_select 0, %s16, %s14
  // Predicated region
  $region2: #{tpu_custom_call.1} parent=0 // pred_check
    _
  $region3: #{tpu_custom_call.1} parent=0 // pred_check_branch
    %19 = sbr.rel (0) target = $region5
  $region4: #{tpu_custom_call.1} parent=0 // pred_region
    _
  $region5: #{tpu_custom_call.1} parent=0 // pred_fallthru
    _
  // Predicated region
  $region6: #{tpu_custom_call.1} parent=0 // pred_check
    _
  $region7: #{tpu_custom_call.1} parent=0 // pred_check_branch
    %21 = sbr.rel (0) target = $region9
  $region8: #{tpu_custom_call.1} parent=0 // pred_region
    _
  $region9: #{tpu_custom_call.1} parent=0 // pred_fallthru
    _
  // Predicated region
  $region10: #{tpu_custom_call.1} parent=0 // pred_check
    _
  $region11: #{tpu_custom_call.1} parent=0 // pred_check_branch
    %23 = sbr.rel (0) target = $region13
  $region12: #{tpu_custom_call.1} parent=0 // pred_region
    _
  $region13: #{tpu_custom_call.1} parent=0 // pred_fallthru
    _
  // Predicated region
  $region14: #{tpu_custom_call.1} parent=0 // pred_check
    _
  $region15: #{tpu_custom_call.1} parent=0 // pred_check_branch
    %25 = sbr.rel (0) target = $region17
  $region16: #{tpu_custom_call.1} parent=0 // pred_region
    _
  $region17: #{tpu_custom_call.1} parent=0 // pred_fallthru
    _
  // Predicated region
  $region18: #{tpu_custom_call.1} parent=0 // pred_check
    _
  $region19: #{tpu_custom_call.1} parent=0 // pred_check_branch
    %27 = sbr.rel (0) target = $region21
  $region20: #{tpu_custom_call.1} parent=0 // pred_region
    _
  $region21: #{tpu_custom_call.1} parent=0 // pred_fallthru
    _
  // Predicated region
  $region22: #{tpu_custom_call.1} parent=0 // pred_check
    _
  $region23: #{tpu_custom_call.1} parent=0 // pred_check_branch
    %29 = sbr.rel (0) target = $region25
  $region24: #{tpu_custom_call.1} parent=0 // pred_region
    _
  $region25: #{tpu_custom_call.1} parent=0 // pred_fallthru
    _
  // Predicated region
  $region26: #{tpu_custom_call.1} parent=0 // pred_check
    _
  $region27: #{tpu_custom_call.1} parent=0 // pred_check_branch
    %31 = sbr.rel (0) target = $region29
  $region28: #{tpu_custom_call.1} parent=0 // pred_region
    _
  $region29: #{tpu_custom_call.1} parent=0 // pred_fallthru
    _
  // Predicated region
  $region30: #{tpu_custom_call.1} parent=0 // pred_check
    _
  $region31: #{tpu_custom_call.1} parent=0 // pred_check_branch
    %33 = sbr.rel (0) target = $region33
  $region32: #{tpu_custom_call.1} parent=0 // pred_region
    _
  $region33: #{tpu_custom_call.1} parent=0 // pred_fallthru
    _
  // Predicated region
  $region34: #{tpu_custom_call.1} parent=0 // pred_check
    _
  $region35: #{tpu_custom_call.1} parent=0 // pred_check_branch
    %35 = sbr.rel (0) target = $region37
  $region36: #{tpu_custom_call.1} parent=0 // pred_region
    _
  $region37: #{tpu_custom_call.1} parent=0 // pred_fallthru
    _
  // Predicated region
  $region38: #{tpu_custom_call.1} parent=0 // pred_check
    _
  $region39: #{tpu_custom_call.1} parent=0 // pred_check_branch
    %37 = sbr.rel (0) target = $region41
  $region40: #{tpu_custom_call.1} parent=0 // pred_region
    _
  $region41: #{tpu_custom_call.1} parent=0 // pred_fallthru
    _
  // Predicated region
  $region42: #{tpu_custom_call.1} parent=0 // pred_check
    _
  $region43: #{tpu_custom_call.1} parent=0 // pred_check_branch
    %39 = sbr.rel (0) target = $region45
  $region44: #{tpu_custom_call.1} parent=0 // pred_region
    _
  $region45: #{tpu_custom_call.1} parent=0 // pred_fallthru
    _
  // Predicated region
  $region46: #{tpu_custom_call.1} parent=0 // pred_check
    _
  $region47: #{tpu_custom_call.1} parent=0 // pred_check_branch
    %41 = sbr.rel (0) target = $region49
  $region48: #{tpu_custom_call.1} parent=0 // pred_region
    _
  $region49: #{tpu_custom_call.1} parent=0 // pred_fallthru
    _
  // Predicated region
  $region50: #{tpu_custom_call.1} parent=0 // pred_check
    _
  $region51: #{tpu_custom_call.1} parent=0 // pred_check_branch
    %43 = sbr.rel (0) target = $region53
  $region52: #{tpu_custom_call.1} parent=0 // pred_region
    _
  $region53: #{tpu_custom_call.1} parent=0 // pred_fallthru
    _
  %v44 = vld [vmem:[%s1] sm:$0x3]
  %v45 = vld [vmem:[%s2] sm:$0xff]
  %v46 = vld [vmem:[%s2 + $0x8] sm:$0xff]
  %v47 = vld [vmem:[%s2 + $0x10] sm:$0xff]
  %v48 = vld [vmem:[%s2 + $0x18] sm:$0xff]
  %v49 = vsub.f32 1.0, %v44
  %v50 = vmul.f32 %v49, -3.4028235e+38
  %v52 = vrot.slane %v50, 1
  %v53 = vperm.slane %v50, 0
  %v54 = vperm.slane %v52, 0
  %v57 = vadd.f32 %v45, %v53
  %v58 = vadd.f32 %v46, %v53
  %v59 = vadd.f32 %v47, %v53
  %v60 = vadd.f32 %v48, %v53
  %v61 = vadd.f32 %v45, %v54
  %v62 = vadd.f32 %v46, %v54
  %v63 = vadd.f32 %v47, %v54
  %v64 = vadd.f32 %v48, %v54
  %v65 = vld [vmem:[%s0] sm:$0xff]
  %v66 = vld [vmem:[%s0 + $0x8] sm:$0xff]
  %v67 = vld [vmem:[%s3] sm:$0xff]
  %v68 = vld [vmem:[%s4] sm:$0x1]
  %v70 = vperm.slane %v68, 0
  %vm72 = vcmask 64512
  %v74 = vsel %vm72, %v65, 0
  %v77 = vsel %vm72, %v66, 0
  %79 = vmatpush.msra.mxu0 0.0
  %80 = vmatpush.msra.mxu0 0.0
  %81 = vmatpush.msra.mxu0 0.0
  %82 = vmatpush.msra.mxu0 0.0
  %83 = vmatpush.msra.mxu0 0.0
  %84 = vmatpush.msra.mxu0 0.0
  %85 = vmatpush.msra.mxu0 0.0
  %86 = vmatpush.msra.mxu0 0.0
  %87 = vmatpush.msra.mxu0 0.0
  %88 = vmatpush.msra.mxu0 0.0
  %89 = vmatpush.msra.mxu0 0.0
  %90 = vmatpush.msra.mxu0 0.0
  %91 = vmatpush.msra.mxu0 0.0
  %92 = vmatpush.msra.mxu0 0.0
  %93 = vmatpush.msra.mxu0 0.0
  %94 = vmatpush.msra.mxu0 %v67
  %95 = vmatmul.f32.gmra.mxu0 %v74
  %v96 = vpop.f32.mrf.mxu0
  %v97 = vadd.f32 %v70, %v96
  %98 = vmatmul.f32.gmra.mxu0 %v77
  %v99 = vpop.f32.mrf.mxu0
  %v100 = vadd.f32 %v70, %v99
  %101 = vdwg.mxu0
  %v102 = vld [vmem:[%s5] sm:$0x1]
  %v103 = vmul.f32 %v97, %v97
  %v104 = vmul.f32 %v100, %v100
  %vm105 = vcmask 261120
  %v106 = vsel %vm105, %v103, 0.0
  %107 = vadd.xlane.f32.xlu0 %v106
  %v108 = vpop.xlane.xlu0 %107
  %v109 = vsel %vm105, %v104, 0.0
  %110 = vadd.xlane.f32.xlu0 %v109
  %v111 = vpop.xlane.xlu0 %110
  %v112 = vrcp.pop 32.0
  %v113 = vmul.f32 32.0, %v112
  %v114 = vsub.f32 1.0, %v113
  %v115 = vmul.f32 %v112, %v114
  %v116 = vadd.f32 %v112, %v115
  %vm117 = vweird.f32 %v112
  %v118 = vsel %vm117, %v112, %v116
  %v119 = vmul.f32 %v108, %v118
  %v120 = vmul.f32 %v111, %v118
  %v121 = vadd.f32 %v119, 1e-06
  %v122 = vadd.f32 %v120, 1e-06
  %v123 = vrsqrt.pop %v121
  %v124 = vmul.f32 %v123, %v121
  %v125 = vmul.f32 %v124, %v123
  %v126 = vmul.f32 0.5, %v125
  %v127 = vsub.f32 1.5, %v126
  %v128 = vmul.f32 %v123, %v127
  %vm129 = vweird.f32 %v121
  %vm130 = vweird.f32 %v123
  %vm131 = vmor %vm129, %vm130
  %v132 = vsel %vm131, %v123, %v128
  %v133 = vrsqrt.pop %v122
  %v134 = vmul.f32 %v133, %v122
  %v135 = vmul.f32 %v134, %v133
  %v136 = vmul.f32 0.5, %v135
  %v137 = vsub.f32 1.5, %v136
  %v138 = vmul.f32 %v133, %v137
  %vm139 = vweird.f32 %v122
  %vm140 = vweird.f32 %v133
  %vm141 = vmor %vm139, %vm140
  %v142 = vsel %vm141, %v133, %v138
  %v143 = vmul.f32 %v97, %v132
  %v144 = vmul.f32 %v100, %v142
  %v146 = vperm.slane %v102, 0
  %v148 = vmul.f32 %v143, %v146
  %v149 = vmul.f32 %v144, %v146
  %v150 = vld [vmem:[%s6] sm:$0xff]
  %v151 = vld [vmem:[%s6 + $0x8] sm:$0xff]
  %v152 = vld [vmem:[%s6 + $0x10] sm:$0xff]
  %v153 = vld [vmem:[%s6 + $0x18] sm:$0xff]
  %v154 = vld [vmem:[%s6 + $0x20] sm:$0xff]
  %v155 = vld [vmem:[%s6 + $0x28] sm:$0xff]
  %v156 = vld [vmem:[%s6 + $0x30] sm:$0xff]
  %v157 = vld [vmem:[%s6 + $0x38] sm:$0xff]
  %v158 = vld [vmem:[%s6 + $0x40] sm:$0xff]
  %v159 = vld [vmem:[%s6 + $0x48] sm:$0xff]
  %v160 = vld [vmem:[%s6 + $0x50] sm:$0xff]
  %v161 = vld [vmem:[%s6 + $0x58] sm:$0xff]
  %v162 = vld [vmem:[%s6 + $0x60] sm:$0xff]
  %v163 = vld [vmem:[%s6 + $0x68] sm:$0xff]
  %v164 = vld [vmem:[%s6 + $0x70] sm:$0xff]
  %v165 = vld [vmem:[%s6 + $0x78] sm:$0xff]
  %v167 = vsel %vm105, %v148, 0
  %169 = vmatpush.msra.mxu0 0.0
  %170 = vmatpush.msra.mxu0 0.0
  %171 = vmatpush.msra.mxu0 0.0
  %172 = vmatpush.msra.mxu0 0.0
  %173 = vmatpush.msra.mxu0 0.0
  %174 = vmatpush.msra.mxu0 0.0
  %175 = vmatpush.msra.mxu0 0.0
  %176 = vmatpush.msra.mxu0 0.0
  %177 = vmatpush.msra.mxu0 0.0
  %178 = vmatpush.msra.mxu0 0.0
  %179 = vmatpush.msra.mxu0 0.0
  %180 = vmatpush.msra.mxu0 0.0
  %181 = vmatpush.msra.mxu0 %v153
  %182 = vmatpush.msra.mxu0 %v152
  %183 = vmatpush.msra.mxu0 %v151
  %184 = vmatpush.msra.mxu0 %v150
  %185 = vmatmul.f32.gmra.mxu0 %v167
  %v186 = vpop.f32.mrf.mxu0
  %v187 = vadd.f32 0.0, %v186
  %188 = vdwg.mxu0
  %189 = vmatpush.msra.mxu0 0.0
  %190 = vmatpush.msra.mxu0 0.0
  %191 = vmatpush.msra.mxu0 0.0
  %192 = vmatpush.msra.mxu0 0.0
  %193 = vmatpush.msra.mxu0 0.0
  %194 = vmatpush.msra.mxu0 0.0
  %195 = vmatpush.msra.mxu0 0.0
  %196 = vmatpush.msra.mxu0 0.0
  %197 = vmatpush.msra.mxu0 0.0
  %198 = vmatpush.msra.mxu0 0.0
  %199 = vmatpush.msra.mxu0 0.0
  %200 = vmatpush.msra.mxu0 0.0
  %201 = vmatpush.msra.mxu0 %v157
  %202 = vmatpush.msra.mxu0 %v156
  %203 = vmatpush.msra.mxu0 %v155
  %204 = vmatpush.msra.mxu0 %v154
  %205 = vmatmul.f32.gmra.mxu0 %v167
  %v206 = vpop.f32.mrf.mxu0
  %v207 = vadd.f32 0.0, %v206
  %208 = vdwg.mxu0
  %209 = vmatpush.msra.mxu0 0.0
  %210 = vmatpush.msra.mxu0 0.0
  %211 = vmatpush.msra.mxu0 0.0
  %212 = vmatpush.msra.mxu0 0.0
  %213 = vmatpush.msra.mxu0 0.0
  %214 = vmatpush.msra.mxu0 0.0
  %215 = vmatpush.msra.mxu0 0.0
  %216 = vmatpush.msra.mxu0 0.0
  %217 = vmatpush.msra.mxu0 0.0
  %218 = vmatpush.msra.mxu0 0.0
  %219 = vmatpush.msra.mxu0 0.0
  %220 = vmatpush.msra.mxu0 0.0
  %221 = vmatpush.msra.mxu0 %v161
  %222 = vmatpush.msra.mxu0 %v160
  %223 = vmatpush.msra.mxu0 %v159
  %224 = vmatpush.msra.mxu0 %v158
  %225 = vmatmul.f32.gmra.mxu0 %v167
  %v226 = vpop.f32.mrf.mxu0
  %v227 = vadd.f32 0.0, %v226
  %228 = vdwg.mxu0
  %229 = vmatpush.msra.mxu0 0.0
  %230 = vmatpush.msra.mxu0 0.0
  %231 = vmatpush.msra.mxu0 0.0
  %232 = vmatpush.msra.mxu0 0.0
  %233 = vmatpush.msra.mxu0 0.0
  %234 = vmatpush.msra.mxu0 0.0
  %235 = vmatpush.msra.mxu0 0.0
  %236 = vmatpush.msra.mxu0 0.0
  %237 = vmatpush.msra.mxu0 0.0
  %238 = vmatpush.msra.mxu0 0.0
  %239 = vmatpush.msra.mxu0 0.0
  %240 = vmatpush.msra.mxu0 0.0
  %241 = vmatpush.msra.mxu0 %v165
  %242 = vmatpush.msra.mxu0 %v164
  %243 = vmatpush.msra.mxu0 %v163
  %244 = vmatpush.msra.mxu0 %v162
  %245 = vmatmul.f32.gmra.mxu0 %v167
  %v246 = vpop.f32.mrf.mxu0
  %v247 = vadd.f32 0.0, %v246
  %248 = vdwg.mxu0
  %v250 = vsel %vm105, %v149, 0
  %252 = vmatpush.msra.mxu0 0.0
  %253 = vmatpush.msra.mxu0 0.0
  %254 = vmatpush.msra.mxu0 0.0
  %255 = vmatpush.msra.mxu0 0.0
  %256 = vmatpush.msra.mxu0 0.0
  %257 = vmatpush.msra.mxu0 0.0
  %258 = vmatpush.msra.mxu0 0.0
  %259 = vmatpush.msra.mxu0 0.0
  %260 = vmatpush.msra.mxu0 0.0
  %261 = vmatpush.msra.mxu0 0.0
  %262 = vmatpush.msra.mxu0 0.0
  %263 = vmatpush.msra.mxu0 0.0
  %264 = vmatpush.msra.mxu0 %v153
  %265 = vmatpush.msra.mxu0 %v152
  %266 = vmatpush.msra.mxu0 %v151
  %267 = vmatpush.msra.mxu0 %v150
  %268 = vmatmul.f32.gmra.mxu0 %v250
  %v269 = vpop.f32.mrf.mxu0
  %v270 = vadd.f32 0.0, %v269
  %271 = vdwg.mxu0
  %272 = vmatpush.msra.mxu0 0.0
  %273 = vmatpush.msra.mxu0 0.0
  %274 = vmatpush.msra.mxu0 0.0
  %275 = vmatpush.msra.mxu0 0.0
  %276 = vmatpush.msra.mxu0 0.0
  %277 = vmatpush.msra.mxu0 0.0
  %278 = vmatpush.msra.mxu0 0.0
  %279 = vmatpush.msra.mxu0 0.0
  %280 = vmatpush.msra.mxu0 0.0
  %281 = vmatpush.msra.mxu0 0.0
  %282 = vmatpush.msra.mxu0 0.0
  %283 = vmatpush.msra.mxu0 0.0
  %284 = vmatpush.msra.mxu0 %v157
  %285 = vmatpush.msra.mxu0 %v156
  %286 = vmatpush.msra.mxu0 %v155
  %287 = vmatpush.msra.mxu0 %v154
  %288 = vmatmul.f32.gmra.mxu0 %v250
  %v289 = vpop.f32.mrf.mxu0
  %v290 = vadd.f32 0.0, %v289
  %291 = vdwg.mxu0
  %292 = vmatpush.msra.mxu0 0.0
  %293 = vmatpush.msra.mxu0 0.0
  %294 = vmatpush.msra.mxu0 0.0
  %295 = vmatpush.msra.mxu0 0.0
  %296 = vmatpush.msra.mxu0 0.0
  %297 = vmatpush.msra.mxu0 0.0
  %298 = vmatpush.msra.mxu0 0.0
  %299 = vmatpush.msra.mxu0 0.0
  %300 = vmatpush.msra.mxu0 0.0
  %301 = vmatpush.msra.mxu0 0.0
  %302 = vmatpush.msra.mxu0 0.0
  %303 = vmatpush.msra.mxu0 0.0
  %304 = vmatpush.msra.mxu0 %v161
  %305 = vmatpush.msra.mxu0 %v160
  %306 = vmatpush.msra.mxu0 %v159
  %307 = vmatpush.msra.mxu0 %v158
  %308 = vmatmul.f32.gmra.mxu0 %v250
  %v309 = vpop.f32.mrf.mxu0
  %v310 = vadd.f32 0.0, %v309
  %311 = vdwg.mxu0
  %312 = vmatpush.msra.mxu0 0.0
  %313 = vmatpush.msra.mxu0 0.0
  %314 = vmatpush.msra.mxu0 0.0
  %315 = vmatpush.msra.mxu0 0.0
  %316 = vmatpush.msra.mxu0 0.0
  %317 = vmatpush.msra.mxu0 0.0
  %318 = vmatpush.msra.mxu0 0.0
  %319 = vmatpush.msra.mxu0 0.0
  %320 = vmatpush.msra.mxu0 0.0
  %321 = vmatpush.msra.mxu0 0.0
  %322 = vmatpush.msra.mxu0 0.0
  %323 = vmatpush.msra.mxu0 0.0
  %324 = vmatpush.msra.mxu0 %v165
  %325 = vmatpush.msra.mxu0 %v164
  %326 = vmatpush.msra.mxu0 %v163
  %327 = vmatpush.msra.mxu0 %v162
  %328 = vmatmul.f32.gmra.mxu0 %v250
  %v329 = vpop.f32.mrf.mxu0
  %v330 = vadd.f32 0.0, %v329
  %331 = vdwg.mxu0
  %333 = vrot.lane.b32.xlu0 %v187, 120
  %v334 = vpop.permute.xlu0 %333
  %v335 = vsel %vm72, %v187, 0
  %v337 = vsel %vm72, %v334, 0
  %339 = vmatpush.xpose.msra.mxu0 0.0
  %340 = vmatpush.xpose.msra.mxu0 0.0
  %341 = vmatpush.xpose.msra.mxu0 0.0
  %342 = vmatpush.xpose.msra.mxu0 0.0
  %343 = vmatpush.xpose.msra.mxu0 0.0
  %344 = vmatpush.xpose.msra.mxu0 0.0
  %345 = vmatpush.xpose.msra.mxu0 0.0
  %346 = vmatpush.xpose.msra.mxu0 0.0
  %347 = vmatpush.xpose.msra.mxu0 0.0
  %348 = vmatpush.xpose.msra.mxu0 0.0
  %349 = vmatpush.xpose.msra.mxu0 0.0
  %350 = vmatpush.xpose.msra.mxu0 0.0
  %351 = vmatpush.xpose.msra.mxu0 0.0
  %352 = vmatpush.xpose.msra.mxu0 0.0
  %353 = vmatpush.xpose.msra.mxu0 0.0
  %354 = vmatpush.xpose.msra.mxu0 %v337
  %355 = vmatmul.f32.gmra.mxu0 %v335
  %v356 = vpop.f32.mrf.mxu0
  %v357 = vadd.f32 %v57, %v356
  %358 = vdwg.mxu0
  %360 = vrot.lane.b32.xlu0 %v207, 120
  %v361 = vpop.permute.xlu0 %360
  %v362 = vsel %vm72, %v207, 0
  %v364 = vsel %vm72, %v361, 0
  %366 = vmatpush.xpose.msra.mxu0 0.0
  %367 = vmatpush.xpose.msra.mxu0 0.0
  %368 = vmatpush.xpose.msra.mxu0 0.0
  %369 = vmatpush.xpose.msra.mxu0 0.0
  %370 = vmatpush.xpose.msra.mxu0 0.0
  %371 = vmatpush.xpose.msra.mxu0 0.0
  %372 = vmatpush.xpose.msra.mxu0 0.0
  %373 = vmatpush.xpose.msra.mxu0 0.0
  %374 = vmatpush.xpose.msra.mxu0 0.0
  %375 = vmatpush.xpose.msra.mxu0 0.0
  %376 = vmatpush.xpose.msra.mxu0 0.0
  %377 = vmatpush.xpose.msra.mxu0 0.0
  %378 = vmatpush.xpose.msra.mxu0 0.0
  %379 = vmatpush.xpose.msra.mxu0 0.0
  %380 = vmatpush.xpose.msra.mxu0 0.0
  %381 = vmatpush.xpose.msra.mxu0 %v364
  %382 = vmatmul.f32.gmra.mxu0 %v362
  %v383 = vpop.f32.mrf.mxu0
  %v384 = vadd.f32 %v58, %v383
  %385 = vdwg.mxu0
  %387 = vrot.lane.b32.xlu0 %v227, 120
  %v388 = vpop.permute.xlu0 %387
  %v389 = vsel %vm72, %v227, 0
  %v391 = vsel %vm72, %v388, 0
  %393 = vmatpush.xpose.msra.mxu0 0.0
  %394 = vmatpush.xpose.msra.mxu0 0.0
  %395 = vmatpush.xpose.msra.mxu0 0.0
  %396 = vmatpush.xpose.msra.mxu0 0.0
  %397 = vmatpush.xpose.msra.mxu0 0.0
  %398 = vmatpush.xpose.msra.mxu0 0.0
  %399 = vmatpush.xpose.msra.mxu0 0.0
  %400 = vmatpush.xpose.msra.mxu0 0.0
  %401 = vmatpush.xpose.msra.mxu0 0.0
  %402 = vmatpush.xpose.msra.mxu0 0.0
  %403 = vmatpush.xpose.msra.mxu0 0.0
  %404 = vmatpush.xpose.msra.mxu0 0.0
  %405 = vmatpush.xpose.msra.mxu0 0.0
  %406 = vmatpush.xpose.msra.mxu0 0.0
  %407 = vmatpush.xpose.msra.mxu0 0.0
  %408 = vmatpush.xpose.msra.mxu0 %v391
  %409 = vmatmul.f32.gmra.mxu0 %v389
  %v410 = vpop.f32.mrf.mxu0
  %v411 = vadd.f32 %v59, %v410
  %412 = vdwg.mxu0
  %414 = vrot.lane.b32.xlu0 %v247, 120
  %v415 = vpop.permute.xlu0 %414
  %v416 = vsel %vm72, %v247, 0
  %v418 = vsel %vm72, %v415, 0
  %420 = vmatpush.xpose.msra.mxu0 0.0
  %421 = vmatpush.xpose.msra.mxu0 0.0
  %422 = vmatpush.xpose.msra.mxu0 0.0
  %423 = vmatpush.xpose.msra.mxu0 0.0
  %424 = vmatpush.xpose.msra.mxu0 0.0
  %425 = vmatpush.xpose.msra.mxu0 0.0
  %426 = vmatpush.xpose.msra.mxu0 0.0
  %427 = vmatpush.xpose.msra.mxu0 0.0
  %428 = vmatpush.xpose.msra.mxu0 0.0
  %429 = vmatpush.xpose.msra.mxu0 0.0
  %430 = vmatpush.xpose.msra.mxu0 0.0
  %431 = vmatpush.xpose.msra.mxu0 0.0
  %432 = vmatpush.xpose.msra.mxu0 0.0
  %433 = vmatpush.xpose.msra.mxu0 0.0
  %434 = vmatpush.xpose.msra.mxu0 0.0
  %435 = vmatpush.xpose.msra.mxu0 %v418
  %436 = vmatmul.f32.gmra.mxu0 %v416
  %v437 = vpop.f32.mrf.mxu0
  %v438 = vadd.f32 %v60, %v437
  %439 = vdwg.mxu0
  %441 = vrot.lane.b32.xlu0 %v270, 120
  %v442 = vpop.permute.xlu0 %441
  %v443 = vsel %vm72, %v270, 0
  %v445 = vsel %vm72, %v442, 0
  %447 = vmatpush.xpose.msra.mxu0 0.0
  %448 = vmatpush.xpose.msra.mxu0 0.0
  %449 = vmatpush.xpose.msra.mxu0 0.0
  %450 = vmatpush.xpose.msra.mxu0 0.0
  %451 = vmatpush.xpose.msra.mxu0 0.0
  %452 = vmatpush.xpose.msra.mxu0 0.0
  %453 = vmatpush.xpose.msra.mxu0 0.0
  %454 = vmatpush.xpose.msra.mxu0 0.0
  %455 = vmatpush.xpose.msra.mxu0 0.0
  %456 = vmatpush.xpose.msra.mxu0 0.0
  %457 = vmatpush.xpose.msra.mxu0 0.0
  %458 = vmatpush.xpose.msra.mxu0 0.0
  %459 = vmatpush.xpose.msra.mxu0 0.0
  %460 = vmatpush.xpose.msra.mxu0 0.0
  %461 = vmatpush.xpose.msra.mxu0 0.0
  %462 = vmatpush.xpose.msra.mxu0 %v445
  %463 = vmatmul.f32.gmra.mxu0 %v443
  %v464 = vpop.f32.mrf.mxu0
  %v465 = vadd.f32 %v61, %v464
  %466 = vdwg.mxu0
  %468 = vrot.lane.b32.xlu0 %v290, 120
  %v469 = vpop.permute.xlu0 %468
  %v470 = vsel %vm72, %v290, 0
  %v472 = vsel %vm72, %v469, 0
  %474 = vmatpush.xpose.msra.mxu0 0.0
  %475 = vmatpush.xpose.msra.mxu0 0.0
  %476 = vmatpush.xpose.msra.mxu0 0.0
  %477 = vmatpush.xpose.msra.mxu0 0.0
  %478 = vmatpush.xpose.msra.mxu0 0.0
  %479 = vmatpush.xpose.msra.mxu0 0.0
  %480 = vmatpush.xpose.msra.mxu0 0.0
  %481 = vmatpush.xpose.msra.mxu0 0.0
  %482 = vmatpush.xpose.msra.mxu0 0.0
  %483 = vmatpush.xpose.msra.mxu0 0.0
  %484 = vmatpush.xpose.msra.mxu0 0.0
  %485 = vmatpush.xpose.msra.mxu0 0.0
  %486 = vmatpush.xpose.msra.mxu0 0.0
  %487 = vmatpush.xpose.msra.mxu0 0.0
  %488 = vmatpush.xpose.msra.mxu0 0.0
  %489 = vmatpush.xpose.msra.mxu0 %v472
  %490 = vmatmul.f32.gmra.mxu0 %v470
  %v491 = vpop.f32.mrf.mxu0
  %v492 = vadd.f32 %v62, %v491
  %493 = vdwg.mxu0
  %495 = vrot.lane.b32.xlu0 %v310, 120
  %v496 = vpop.permute.xlu0 %495
  %v497 = vsel %vm72, %v310, 0
  %v499 = vsel %vm72, %v496, 0
  %501 = vmatpush.xpose.msra.mxu0 0.0
  %502 = vmatpush.xpose.msra.mxu0 0.0
  %503 = vmatpush.xpose.msra.mxu0 0.0
  %504 = vmatpush.xpose.msra.mxu0 0.0
  %505 = vmatpush.xpose.msra.mxu0 0.0
  %506 = vmatpush.xpose.msra.mxu0 0.0
  %507 = vmatpush.xpose.msra.mxu0 0.0
  %508 = vmatpush.xpose.msra.mxu0 0.0
  %509 = vmatpush.xpose.msra.mxu0 0.0
  %510 = vmatpush.xpose.msra.mxu0 0.0
  %511 = vmatpush.xpose.msra.mxu0 0.0
  %512 = vmatpush.xpose.msra.mxu0 0.0
  %513 = vmatpush.xpose.msra.mxu0 0.0
  %514 = vmatpush.xpose.msra.mxu0 0.0
  %515 = vmatpush.xpose.msra.mxu0 0.0
  %516 = vmatpush.xpose.msra.mxu0 %v499
  %517 = vmatmul.f32.gmra.mxu0 %v497
  %v518 = vpop.f32.mrf.mxu0
  %v519 = vadd.f32 %v63, %v518
  %520 = vdwg.mxu0
  %522 = vrot.lane.b32.xlu0 %v330, 120
  %v523 = vpop.permute.xlu0 %522
  %v524 = vsel %vm72, %v330, 0
  %v526 = vsel %vm72, %v523, 0
  %528 = vmatpush.xpose.msra.mxu0 0.0
  %529 = vmatpush.xpose.msra.mxu0 0.0
  %530 = vmatpush.xpose.msra.mxu0 0.0
  %531 = vmatpush.xpose.msra.mxu0 0.0
  %532 = vmatpush.xpose.msra.mxu0 0.0
  %533 = vmatpush.xpose.msra.mxu0 0.0
  %534 = vmatpush.xpose.msra.mxu0 0.0
  %535 = vmatpush.xpose.msra.mxu0 0.0
  %536 = vmatpush.xpose.msra.mxu0 0.0
  %537 = vmatpush.xpose.msra.mxu0 0.0
  %538 = vmatpush.xpose.msra.mxu0 0.0
  %539 = vmatpush.xpose.msra.mxu0 0.0
  %540 = vmatpush.xpose.msra.mxu0 0.0
  %541 = vmatpush.xpose.msra.mxu0 0.0
  %542 = vmatpush.xpose.msra.mxu0 0.0
  %543 = vmatpush.xpose.msra.mxu0 %v526
  %544 = vmatmul.f32.gmra.mxu0 %v524
  %v545 = vpop.f32.mrf.mxu0
  %v546 = vadd.f32 %v64, %v545
  %547 = vdwg.mxu0
  %v548 = vsel %vm72, %v357, -inf
  %549 = vmax.xlane.f32.xlu0 %v548
  %v550 = vpop.xlane.xlu0 %549
  %v551 = vsel %vm72, %v384, -inf
  %552 = vmax.xlane.f32.xlu0 %v551
  %v553 = vpop.xlane.xlu0 %552
  %v554 = vsel %vm72, %v411, -inf
  %555 = vmax.xlane.f32.xlu0 %v554
  %v556 = vpop.xlane.xlu0 %555
  %v557 = vsel %vm72, %v438, -inf
  %558 = vmax.xlane.f32.xlu0 %v557
  %v559 = vpop.xlane.xlu0 %558
  %v560 = vsel %vm72, %v465, -inf
  %561 = vmax.xlane.f32.xlu0 %v560
  %v562 = vpop.xlane.xlu0 %561
  %v563 = vsel %vm72, %v492, -inf
  %564 = vmax.xlane.f32.xlu0 %v563
  %v565 = vpop.xlane.xlu0 %564
  %v566 = vsel %vm72, %v519, -inf
  %567 = vmax.xlane.f32.xlu0 %v566
  %v568 = vpop.xlane.xlu0 %567
  %v569 = vsel %vm72, %v546, -inf
  %570 = vmax.xlane.f32.xlu0 %v569
  %v571 = vpop.xlane.xlu0 %570
  %v572 = vsub.f32 %v357, %v550
  %v573 = vsub.f32 %v384, %v553
  %v574 = vsub.f32 %v411, %v556
  %v575 = vsub.f32 %v438, %v559
  %v576 = vsub.f32 %v465, %v562
  %v577 = vsub.f32 %v492, %v565
  %v578 = vsub.f32 %v519, %v568
  %v579 = vsub.f32 %v546, %v571
  %v580 = vmul.f32 %v572, 1.442695
  %v581 = vpow.pop %v580
  %v582 = vmul.f32 %v573, 1.442695
  %v583 = vpow.pop %v582
  %v584 = vmul.f32 %v574, 1.442695
  %v585 = vpow.pop %v584
  %v586 = vmul.f32 %v575, 1.442695
  %v587 = vpow.pop %v586
  %v588 = vmul.f32 %v576, 1.442695
  %v589 = vpow.pop %v588
  %v590 = vmul.f32 %v577, 1.442695
  %v591 = vpow.pop %v590
  %v592 = vmul.f32 %v578, 1.442695
  %v593 = vpow.pop %v592
  %v594 = vmul.f32 %v579, 1.442695
  %v595 = vpow.pop %v594
  %v596 = vsel %vm72, %v581, 0.0
  %597 = vadd.xlane.f32.xlu0 %v596
  %v598 = vpop.xlane.xlu0 %597
  %v599 = vsel %vm72, %v583, 0.0
  %600 = vadd.xlane.f32.xlu0 %v599
  %v601 = vpop.xlane.xlu0 %600
  %v602 = vsel %vm72, %v585, 0.0
  %603 = vadd.xlane.f32.xlu0 %v602
  %v604 = vpop.xlane.xlu0 %603
  %v605 = vsel %vm72, %v587, 0.0
  %606 = vadd.xlane.f32.xlu0 %v605
  %v607 = vpop.xlane.xlu0 %606
  %v608 = vsel %vm72, %v589, 0.0
  %609 = vadd.xlane.f32.xlu0 %v608
  %v610 = vpop.xlane.xlu0 %609
  %v611 = vsel %vm72, %v591, 0.0
  %612 = vadd.xlane.f32.xlu0 %v611
  %v613 = vpop.xlane.xlu0 %612
  %v614 = vsel %vm72, %v593, 0.0
  %615 = vadd.xlane.f32.xlu0 %v614
  %v616 = vpop.xlane.xlu0 %615
  %v617 = vsel %vm72, %v595, 0.0
  %618 = vadd.xlane.f32.xlu0 %v617
  %v619 = vpop.xlane.xlu0 %618
  %v620 = vrcp.pop %v598
  %v621 = vrcp.pop %v601
  %v622 = vrcp.pop %v604
  %v623 = vrcp.pop %v607
  %v624 = vrcp.pop %v610
  %v625 = vrcp.pop %v613
  %v626 = vrcp.pop %v616
  %v627 = vrcp.pop %v619
  %v628 = vmul.f32 %v581, %v620
  %v629 = vmul.f32 %v583, %v621
  %v630 = vmul.f32 %v585, %v622
  %v631 = vmul.f32 %v587, %v623
  %v632 = vmul.f32 %v589, %v624
  %v633 = vmul.f32 %v591, %v625
  %v634 = vmul.f32 %v593, %v626
  %v635 = vmul.f32 %v595, %v627
  %636 = vrot.lane.b32.xlu0 %v187, 112
  %v637 = vpop.permute.xlu0 %636
  %v640 = vsel %vm72, %v628, 0
  %642 = vmatpush.msra.mxu0 0.0
  %643 = vmatpush.msra.mxu0 0.0
  %644 = vmatpush.msra.mxu0 0.0
  %645 = vmatpush.msra.mxu0 0.0
  %646 = vmatpush.msra.mxu0 0.0
  %647 = vmatpush.msra.mxu0 0.0
  %648 = vmatpush.msra.mxu0 0.0
  %649 = vmatpush.msra.mxu0 0.0
  %650 = vmatpush.msra.mxu0 0.0
  %651 = vmatpush.msra.mxu0 0.0
  %652 = vmatpush.msra.mxu0 0.0
  %653 = vmatpush.msra.mxu0 0.0
  %654 = vmatpush.msra.mxu0 0.0
  %655 = vmatpush.msra.mxu0 0.0
  %656 = vmatpush.msra.mxu0 0.0
  %657 = vmatpush.msra.mxu0 %v637
  %658 = vmatmul.f32.gmra.mxu0 %v640
  %v659 = vpop.f32.mrf.mxu0
  %v660 = vadd.f32 0.0, %v659
  %661 = vdwg.mxu0
  %662 = vrot.lane.b32.xlu0 %v207, 112
  %v663 = vpop.permute.xlu0 %662
  %v666 = vsel %vm72, %v629, 0
  %668 = vmatpush.msra.mxu0 0.0
  %669 = vmatpush.msra.mxu0 0.0
  %670 = vmatpush.msra.mxu0 0.0
  %671 = vmatpush.msra.mxu0 0.0
  %672 = vmatpush.msra.mxu0 0.0
  %673 = vmatpush.msra.mxu0 0.0
  %674 = vmatpush.msra.mxu0 0.0
  %675 = vmatpush.msra.mxu0 0.0
  %676 = vmatpush.msra.mxu0 0.0
  %677 = vmatpush.msra.mxu0 0.0
  %678 = vmatpush.msra.mxu0 0.0
  %679 = vmatpush.msra.mxu0 0.0
  %680 = vmatpush.msra.mxu0 0.0
  %681 = vmatpush.msra.mxu0 0.0
  %682 = vmatpush.msra.mxu0 0.0
  %683 = vmatpush.msra.mxu0 %v663
  %684 = vmatmul.f32.gmra.mxu0 %v666
  %v685 = vpop.f32.mrf.mxu0
  %v686 = vadd.f32 0.0, %v685
  %687 = vdwg.mxu0
  %688 = vrot.lane.b32.xlu0 %v227, 112
  %v689 = vpop.permute.xlu0 %688
  %v692 = vsel %vm72, %v630, 0
  %694 = vmatpush.msra.mxu0 0.0
  %695 = vmatpush.msra.mxu0 0.0
  %696 = vmatpush.msra.mxu0 0.0
  %697 = vmatpush.msra.mxu0 0.0
  %698 = vmatpush.msra.mxu0 0.0
  %699 = vmatpush.msra.mxu0 0.0
  %700 = vmatpush.msra.mxu0 0.0
  %701 = vmatpush.msra.mxu0 0.0
  %702 = vmatpush.msra.mxu0 0.0
  %703 = vmatpush.msra.mxu0 0.0
  %704 = vmatpush.msra.mxu0 0.0
  %705 = vmatpush.msra.mxu0 0.0
  %706 = vmatpush.msra.mxu0 0.0
  %707 = vmatpush.msra.mxu0 0.0
  %708 = vmatpush.msra.mxu0 0.0
  %709 = vmatpush.msra.mxu0 %v689
  %710 = vmatmul.f32.gmra.mxu0 %v692
  %v711 = vpop.f32.mrf.mxu0
  %v712 = vadd.f32 0.0, %v711
  %713 = vdwg.mxu0
  %714 = vrot.lane.b32.xlu0 %v247, 112
  %v715 = vpop.permute.xlu0 %714
  %v718 = vsel %vm72, %v631, 0
  %720 = vmatpush.msra.mxu0 0.0
  %721 = vmatpush.msra.mxu0 0.0
  %722 = vmatpush.msra.mxu0 0.0
  %723 = vmatpush.msra.mxu0 0.0
  %724 = vmatpush.msra.mxu0 0.0
  %725 = vmatpush.msra.mxu0 0.0
  %726 = vmatpush.msra.mxu0 0.0
  %727 = vmatpush.msra.mxu0 0.0
  %728 = vmatpush.msra.mxu0 0.0
  %729 = vmatpush.msra.mxu0 0.0
  %730 = vmatpush.msra.mxu0 0.0
  %731 = vmatpush.msra.mxu0 0.0
  %732 = vmatpush.msra.mxu0 0.0
  %733 = vmatpush.msra.mxu0 0.0
  %734 = vmatpush.msra.mxu0 0.0
  %735 = vmatpush.msra.mxu0 %v715
  %736 = vmatmul.f32.gmra.mxu0 %v718
  %v737 = vpop.f32.mrf.mxu0
  %v738 = vadd.f32 0.0, %v737
  %739 = vdwg.mxu0
  %740 = vrot.lane.b32.xlu0 %v270, 112
  %v741 = vpop.permute.xlu0 %740
  %v744 = vsel %vm72, %v632, 0
  %746 = vmatpush.msra.mxu0 0.0
  %747 = vmatpush.msra.mxu0 0.0
  %748 = vmatpush.msra.mxu0 0.0
  %749 = vmatpush.msra.mxu0 0.0
  %750 = vmatpush.msra.mxu0 0.0
  %751 = vmatpush.msra.mxu0 0.0
  %752 = vmatpush.msra.mxu0 0.0
  %753 = vmatpush.msra.mxu0 0.0
  %754 = vmatpush.msra.mxu0 0.0
  %755 = vmatpush.msra.mxu0 0.0
  %756 = vmatpush.msra.mxu0 0.0
  %757 = vmatpush.msra.mxu0 0.0
  %758 = vmatpush.msra.mxu0 0.0
  %759 = vmatpush.msra.mxu0 0.0
  %760 = vmatpush.msra.mxu0 0.0
  %761 = vmatpush.msra.mxu0 %v741
  %762 = vmatmul.f32.gmra.mxu0 %v744
  %v763 = vpop.f32.mrf.mxu0
  %v764 = vadd.f32 0.0, %v763
  %765 = vdwg.mxu0
  %766 = vrot.lane.b32.xlu0 %v290, 112
  %v767 = vpop.permute.xlu0 %766
  %v770 = vsel %vm72, %v633, 0
  %772 = vmatpush.msra.mxu0 0.0
  %773 = vmatpush.msra.mxu0 0.0
  %774 = vmatpush.msra.mxu0 0.0
  %775 = vmatpush.msra.mxu0 0.0
  %776 = vmatpush.msra.mxu0 0.0
  %777 = vmatpush.msra.mxu0 0.0
  %778 = vmatpush.msra.mxu0 0.0
  %779 = vmatpush.msra.mxu0 0.0
  %780 = vmatpush.msra.mxu0 0.0
  %781 = vmatpush.msra.mxu0 0.0
  %782 = vmatpush.msra.mxu0 0.0
  %783 = vmatpush.msra.mxu0 0.0
  %784 = vmatpush.msra.mxu0 0.0
  %785 = vmatpush.msra.mxu0 0.0
  %786 = vmatpush.msra.mxu0 0.0
  %787 = vmatpush.msra.mxu0 %v767
  %788 = vmatmul.f32.gmra.mxu0 %v770
  %v789 = vpop.f32.mrf.mxu0
  %v790 = vadd.f32 0.0, %v789
  %791 = vdwg.mxu0
  %792 = vrot.lane.b32.xlu0 %v310, 112
  %v793 = vpop.permute.xlu0 %792
  %v796 = vsel %vm72, %v634, 0
  %798 = vmatpush.msra.mxu0 0.0
  %799 = vmatpush.msra.mxu0 0.0
  %800 = vmatpush.msra.mxu0 0.0
  %801 = vmatpush.msra.mxu0 0.0
  %802 = vmatpush.msra.mxu0 0.0
  %803 = vmatpush.msra.mxu0 0.0
  %804 = vmatpush.msra.mxu0 0.0
  %805 = vmatpush.msra.mxu0 0.0
  %806 = vmatpush.msra.mxu0 0.0
  %807 = vmatpush.msra.mxu0 0.0
  %808 = vmatpush.msra.mxu0 0.0
  %809 = vmatpush.msra.mxu0 0.0
  %810 = vmatpush.msra.mxu0 0.0
  %811 = vmatpush.msra.mxu0 0.0
  %812 = vmatpush.msra.mxu0 0.0
  %813 = vmatpush.msra.mxu0 %v793
  %814 = vmatmul.f32.gmra.mxu0 %v796
  %v815 = vpop.f32.mrf.mxu0
  %v816 = vadd.f32 0.0, %v815
  %817 = vdwg.mxu0
  %818 = vrot.lane.b32.xlu0 %v330, 112
  %v819 = vpop.permute.xlu0 %818
  %v822 = vsel %vm72, %v635, 0
  %824 = vmatpush.msra.mxu0 0.0
  %825 = vmatpush.msra.mxu0 0.0
  %826 = vmatpush.msra.mxu0 0.0
  %827 = vmatpush.msra.mxu0 0.0
  %828 = vmatpush.msra.mxu0 0.0
  %829 = vmatpush.msra.mxu0 0.0
  %830 = vmatpush.msra.mxu0 0.0
  %831 = vmatpush.msra.mxu0 0.0
  %832 = vmatpush.msra.mxu0 0.0
  %833 = vmatpush.msra.mxu0 0.0
  %834 = vmatpush.msra.mxu0 0.0
  %835 = vmatpush.msra.mxu0 0.0
  %836 = vmatpush.msra.mxu0 0.0
  %837 = vmatpush.msra.mxu0 0.0
  %838 = vmatpush.msra.mxu0 0.0
  %839 = vmatpush.msra.mxu0 %v819
  %840 = vmatmul.f32.gmra.mxu0 %v822
  %v841 = vpop.f32.mrf.mxu0
  %v842 = vadd.f32 0.0, %v841
  %843 = vdwg.mxu0
  %v844 = vld [vmem:[%s7] sm:$0xff]
  %v845 = vld [vmem:[%s7 + $0x8] sm:$0xff]
  %v846 = vld [vmem:[%s7 + $0x10] sm:$0xff]
  %v847 = vld [vmem:[%s7 + $0x18] sm:$0xff]
  %v849 = vsel %vm72, %v660, 0
  %851 = vmatpush.msra.mxu0 0.0
  %852 = vmatpush.msra.mxu0 0.0
  %853 = vmatpush.msra.mxu0 0.0
  %854 = vmatpush.msra.mxu0 0.0
  %855 = vmatpush.msra.mxu0 0.0
  %856 = vmatpush.msra.mxu0 0.0
  %857 = vmatpush.msra.mxu0 0.0
  %858 = vmatpush.msra.mxu0 0.0
  %859 = vmatpush.msra.mxu0 0.0
  %860 = vmatpush.msra.mxu0 0.0
  %861 = vmatpush.msra.mxu0 0.0
  %862 = vmatpush.msra.mxu0 0.0
  %863 = vmatpush.msra.mxu0 0.0
  %864 = vmatpush.msra.mxu0 0.0
  %865 = vmatpush.msra.mxu0 0.0
  %866 = vmatpush.msra.mxu0 %v844
  %867 = vmatmul.f32.gmra.mxu0 %v849
  %v868 = vpop.f32.mrf.mxu0
  %v869 = vadd.f32 0.0, %v868
  %870 = vdwg.mxu0
  %v872 = vsel %vm72, %v686, 0
  %874 = vmatpush.msra.mxu0 0.0
  %875 = vmatpush.msra.mxu0 0.0
  %876 = vmatpush.msra.mxu0 0.0
  %877 = vmatpush.msra.mxu0 0.0
  %878 = vmatpush.msra.mxu0 0.0
  %879 = vmatpush.msra.mxu0 0.0
  %880 = vmatpush.msra.mxu0 0.0
  %881 = vmatpush.msra.mxu0 0.0
  %882 = vmatpush.msra.mxu0 0.0
  %883 = vmatpush.msra.mxu0 0.0
  %884 = vmatpush.msra.mxu0 0.0
  %885 = vmatpush.msra.mxu0 0.0
  %886 = vmatpush.msra.mxu0 0.0
  %887 = vmatpush.msra.mxu0 0.0
  %888 = vmatpush.msra.mxu0 0.0
  %889 = vmatpush.msra.mxu0 %v845
  %890 = vmatmul.f32.gmra.mxu0 %v872
  %v891 = vpop.f32.mrf.mxu0
  %v892 = vadd.f32 0.0, %v891
  %893 = vdwg.mxu0
  %v895 = vsel %vm72, %v712, 0
  %897 = vmatpush.msra.mxu0 0.0
  %898 = vmatpush.msra.mxu0 0.0
  %899 = vmatpush.msra.mxu0 0.0
  %900 = vmatpush.msra.mxu0 0.0
  %901 = vmatpush.msra.mxu0 0.0
  %902 = vmatpush.msra.mxu0 0.0
  %903 = vmatpush.msra.mxu0 0.0
  %904 = vmatpush.msra.mxu0 0.0
  %905 = vmatpush.msra.mxu0 0.0
  %906 = vmatpush.msra.mxu0 0.0
  %907 = vmatpush.msra.mxu0 0.0
  %908 = vmatpush.msra.mxu0 0.0
  %909 = vmatpush.msra.mxu0 0.0
  %910 = vmatpush.msra.mxu0 0.0
  %911 = vmatpush.msra.mxu0 0.0
  %912 = vmatpush.msra.mxu0 %v846
  %913 = vmatmul.f32.gmra.mxu0 %v895
  %v914 = vpop.f32.mrf.mxu0
  %v915 = vadd.f32 0.0, %v914
  %916 = vdwg.mxu0
  %v918 = vsel %vm72, %v738, 0
  %920 = vmatpush.msra.mxu0 0.0
  %921 = vmatpush.msra.mxu0 0.0
  %922 = vmatpush.msra.mxu0 0.0
  %923 = vmatpush.msra.mxu0 0.0
  %924 = vmatpush.msra.mxu0 0.0
  %925 = vmatpush.msra.mxu0 0.0
  %926 = vmatpush.msra.mxu0 0.0
  %927 = vmatpush.msra.mxu0 0.0
  %928 = vmatpush.msra.mxu0 0.0
  %929 = vmatpush.msra.mxu0 0.0
  %930 = vmatpush.msra.mxu0 0.0
  %931 = vmatpush.msra.mxu0 0.0
  %932 = vmatpush.msra.mxu0 0.0
  %933 = vmatpush.msra.mxu0 0.0
  %934 = vmatpush.msra.mxu0 0.0
  %935 = vmatpush.msra.mxu0 %v847
  %936 = vmatmul.f32.gmra.mxu0 %v918
  %v937 = vpop.f32.mrf.mxu0
  %v938 = vadd.f32 0.0, %v937
  %939 = vdwg.mxu0
  %v941 = vsel %vm72, %v764, 0
  %943 = vmatpush.msra.mxu0 0.0
  %944 = vmatpush.msra.mxu0 0.0
  %945 = vmatpush.msra.mxu0 0.0
  %946 = vmatpush.msra.mxu0 0.0
  %947 = vmatpush.msra.mxu0 0.0
  %948 = vmatpush.msra.mxu0 0.0
  %949 = vmatpush.msra.mxu0 0.0
  %950 = vmatpush.msra.mxu0 0.0
  %951 = vmatpush.msra.mxu0 0.0
  %952 = vmatpush.msra.mxu0 0.0
  %953 = vmatpush.msra.mxu0 0.0
  %954 = vmatpush.msra.mxu0 0.0
  %955 = vmatpush.msra.mxu0 0.0
  %956 = vmatpush.msra.mxu0 0.0
  %957 = vmatpush.msra.mxu0 0.0
  %958 = vmatpush.msra.mxu0 %v844
  %959 = vmatmul.f32.gmra.mxu0 %v941
  %v960 = vpop.f32.mrf.mxu0
  %v961 = vadd.f32 0.0, %v960
  %962 = vdwg.mxu0
  %v964 = vsel %vm72, %v790, 0
  %966 = vmatpush.msra.mxu0 0.0
  %967 = vmatpush.msra.mxu0 0.0
  %968 = vmatpush.msra.mxu0 0.0
  %969 = vmatpush.msra.mxu0 0.0
  %970 = vmatpush.msra.mxu0 0.0
  %971 = vmatpush.msra.mxu0 0.0
  %972 = vmatpush.msra.mxu0 0.0
  %973 = vmatpush.msra.mxu0 0.0
  %974 = vmatpush.msra.mxu0 0.0
  %975 = vmatpush.msra.mxu0 0.0
  %976 = vmatpush.msra.mxu0 0.0
  %977 = vmatpush.msra.mxu0 0.0
  %978 = vmatpush.msra.mxu0 0.0
  %979 = vmatpush.msra.mxu0 0.0
  %980 = vmatpush.msra.mxu0 0.0
  %981 = vmatpush.msra.mxu0 %v845
  %982 = vmatmul.f32.gmra.mxu0 %v964
  %v983 = vpop.f32.mrf.mxu0
  %v984 = vadd.f32 0.0, %v983
  %985 = vdwg.mxu0
  %v987 = vsel %vm72, %v816, 0
  %989 = vmatpush.msra.mxu0 0.0
  %990 = vmatpush.msra.mxu0 0.0
  %991 = vmatpush.msra.mxu0 0.0
  %992 = vmatpush.msra.mxu0 0.0
  %993 = vmatpush.msra.mxu0 0.0
  %994 = vmatpush.msra.mxu0 0.0
  %995 = vmatpush.msra.mxu0 0.0
  %996 = vmatpush.msra.mxu0 0.0
  %997 = vmatpush.msra.mxu0 0.0
  %998 = vmatpush.msra.mxu0 0.0
  %999 = vmatpush.msra.mxu0 0.0
  %1000 = vmatpush.msra.mxu0 0.0
  %1001 = vmatpush.msra.mxu0 0.0
  %1002 = vmatpush.msra.mxu0 0.0
  %1003 = vmatpush.msra.mxu0 0.0
  %1004 = vmatpush.msra.mxu0 %v846
  %1005 = vmatmul.f32.gmra.mxu0 %v987
  %v1006 = vpop.f32.mrf.mxu0
  %v1007 = vadd.f32 0.0, %v1006
  %1008 = vdwg.mxu0
  %v1010 = vsel %vm72, %v842, 0
  %1012 = vmatpush.msra.mxu0 0.0
  %1013 = vmatpush.msra.mxu0 0.0
  %1014 = vmatpush.msra.mxu0 0.0
  %1015 = vmatpush.msra.mxu0 0.0
  %1016 = vmatpush.msra.mxu0 0.0
  %1017 = vmatpush.msra.mxu0 0.0
  %1018 = vmatpush.msra.mxu0 0.0
  %1019 = vmatpush.msra.mxu0 0.0
  %1020 = vmatpush.msra.mxu0 0.0
  %1021 = vmatpush.msra.mxu0 0.0
  %1022 = vmatpush.msra.mxu0 0.0
  %1023 = vmatpush.msra.mxu0 0.0
  %1024 = vmatpush.msra.mxu0 0.0
  %1025 = vmatpush.msra.mxu0 0.0
  %1026 = vmatpush.msra.mxu0 0.0
  %1027 = vmatpush.msra.mxu0 %v847
  %1028 = vmatmul.f32.gmra.mxu0 %v1010
  %v1029 = vpop.f32.mrf.mxu0
  %v1030 = vadd.f32 0.0, %v1029
  %1031 = vdwg.mxu0
  %v1032 = vsel %vm105, %v869, 0.0
  %v1033 = vsel %vm105, %v892, 0.0
  %v1034 = vadd.f32 %v1032, %v1033
  %v1035 = vsel %vm105, %v915, 0.0
  %v1036 = vadd.f32 %v1034, %v1035
  %v1037 = vsel %vm105, %v938, 0.0
  %v1038 = vadd.f32 %v1036, %v1037
  %v1039 = vsel %vm105, %v961, 0.0
  %v1040 = vsel %vm105, %v984, 0.0
  %v1041 = vadd.f32 %v1039, %v1040
  %v1042 = vsel %vm105, %v1007, 0.0
  %v1043 = vadd.f32 %v1041, %v1042
  %v1044 = vsel %vm105, %v1030, 0.0
  %v1045 = vadd.f32 %v1043, %v1044
  %v1046 = vadd.f32 %v97, %v1038
  %v1047 = vadd.f32 %v100, %v1045
  %v1048 = vld [vmem:[%s8] sm:$0x1]
  %v1049 = vmul.f32 %v1046, %v1046
  %v1050 = vmul.f32 %v1047, %v1047
  %v1051 = vsel %vm105, %v1049, 0.0
  %1052 = vadd.xlane.f32.xlu0 %v1051
  %v1053 = vpop.xlane.xlu0 %1052
  %v1054 = vsel %vm105, %v1050, 0.0
  %1055 = vadd.xlane.f32.xlu0 %v1054
  %v1056 = vpop.xlane.xlu0 %1055
  %v1057 = vmul.f32 %v1053, %v118
  %v1058 = vmul.f32 %v1056, %v118
  %v1059 = vadd.f32 %v1057, 1e-06
  %v1060 = vadd.f32 %v1058, 1e-06
  %v1061 = vrsqrt.pop %v1059
  %v1062 = vmul.f32 %v1061, %v1059
  %v1063 = vmul.f32 %v1062, %v1061
  %v1064 = vmul.f32 0.5, %v1063
  %v1065 = vsub.f32 1.5, %v1064
  %v1066 = vmul.f32 %v1061, %v1065
  %vm1067 = vweird.f32 %v1059
  %vm1068 = vweird.f32 %v1061
  %vm1069 = vmor %vm1067, %vm1068
  %v1070 = vsel %vm1069, %v1061, %v1066
  %v1071 = vrsqrt.pop %v1060
  %v1072 = vmul.f32 %v1071, %v1060
  %v1073 = vmul.f32 %v1072, %v1071
  %v1074 = vmul.f32 0.5, %v1073
  %v1075 = vsub.f32 1.5, %v1074
  %v1076 = vmul.f32 %v1071, %v1075
  %vm1077 = vweird.f32 %v1060
  %vm1078 = vweird.f32 %v1071
  %vm1079 = vmor %vm1077, %vm1078
  %v1080 = vsel %vm1079, %v1071, %v1076
  %v1081 = vmul.f32 %v1046, %v1070
  %v1082 = vmul.f32 %v1047, %v1080
  %v1084 = vperm.slane %v1048, 0
  %v1086 = vmul.f32 %v1081, %v1084
  %v1087 = vmul.f32 %v1082, %v1084
  %v1088 = vld [vmem:[%s9] sm:$0xff]
  %v1089 = vld [vmem:[%s9 + $0x8] sm:$0xff]
  %v1090 = vld [vmem:[%s9 + $0x10] sm:$0xff]
  %v1091 = vld [vmem:[%s9 + $0x18] sm:$0xff]
  %v1093 = vsel %vm105, %v1086, 0
  %v1096 = vsel %vm105, %v1087, 0
  %1098 = vmatpush.msra.mxu0 0.0
  %1099 = vmatpush.msra.mxu0 0.0
  %1100 = vmatpush.msra.mxu0 0.0
  %1101 = vmatpush.msra.mxu0 0.0
  %1102 = vmatpush.msra.mxu0 0.0
  %1103 = vmatpush.msra.mxu0 0.0
  %1104 = vmatpush.msra.mxu0 0.0
  %1105 = vmatpush.msra.mxu0 0.0
  %1106 = vmatpush.msra.mxu0 0.0
  %1107 = vmatpush.msra.mxu0 0.0
  %1108 = vmatpush.msra.mxu0 0.0
  %1109 = vmatpush.msra.mxu0 0.0
  %1110 = vmatpush.msra.mxu0 %v1091
  %1111 = vmatpush.msra.mxu0 %v1090
  %1112 = vmatpush.msra.mxu0 %v1089
  %1113 = vmatpush.msra.mxu0 %v1088
  %1114 = vmatmul.f32.gmra.mxu0 %v1093
  %v1115 = vpop.f32.mrf.mxu0
  %v1116 = vadd.f32 0.0, %v1115
  %1117 = vmatmul.f32.gmra.mxu0 %v1096
  %v1118 = vpop.f32.mrf.mxu0
  %v1119 = vadd.f32 0.0, %v1118
  %1120 = vdwg.mxu0
  %v1121 = vmax.f32 %v1116, 0.0
  %v1122 = vmax.f32 %v1119, 0.0
  %v1123 = vld [vmem:[%s10] sm:$0xff]
  %v1124 = vld [vmem:[%s10 + $0x8] sm:$0xff]
  %v1125 = vld [vmem:[%s10 + $0x10] sm:$0xff]
  %v1126 = vld [vmem:[%s10 + $0x18] sm:$0xff]
  %v1127 = vld [vmem:[%s10 + $0x20] sm:$0xff]
  %v1128 = vld [vmem:[%s10 + $0x28] sm:$0xff]
  %v1129 = vld [vmem:[%s10 + $0x30] sm:$0xff]
  %v1130 = vld [vmem:[%s10 + $0x38] sm:$0xff]
  %v1131 = vld [vmem:[%s10 + $0x40] sm:$0xff]
  %v1132 = vld [vmem:[%s10 + $0x48] sm:$0xff]
  %v1133 = vld [vmem:[%s10 + $0x50] sm:$0xff]
  %v1134 = vld [vmem:[%s10 + $0x58] sm:$0xff]
  %v1135 = vld [vmem:[%s10 + $0x60] sm:$0xff]
  %v1136 = vld [vmem:[%s10 + $0x68] sm:$0xff]
  %v1137 = vld [vmem:[%s10 + $0x70] sm:$0xff]
  %v1138 = vld [vmem:[%s10 + $0x78] sm:$0xff]
  %1139 = vmatpush.msra.mxu0 %v1138
  %1140 = vmatpush.msra.mxu0 %v1137
  %1141 = vmatpush.msra.mxu0 %v1136
  %1142 = vmatpush.msra.mxu0 %v1135
  %1143 = vmatpush.msra.mxu0 %v1134
  %1144 = vmatpush.msra.mxu0 %v1133
  %1145 = vmatpush.msra.mxu0 %v1132
  %1146 = vmatpush.msra.mxu0 %v1131
  %1147 = vmatpush.msra.mxu0 %v1130
  %1148 = vmatpush.msra.mxu0 %v1129
  %1149 = vmatpush.msra.mxu0 %v1128
  %1150 = vmatpush.msra.mxu0 %v1127
  %1151 = vmatpush.msra.mxu0 %v1126
  %1152 = vmatpush.msra.mxu0 %v1125
  %1153 = vmatpush.msra.mxu0 %v1124
  %1154 = vmatpush.msra.mxu0 %v1123
  %1155 = vmatmul.f32.gmra.mxu0 %v1121
  %v1156 = vpop.f32.mrf.mxu0
  %v1157 = vadd.f32 0.0, %v1156
  %1158 = vmatmul.f32.gmra.mxu0 %v1122
  %v1159 = vpop.f32.mrf.mxu0
  %v1160 = vadd.f32 0.0, %v1159
  %1161 = vdwg.mxu0
  %v1162 = vadd.f32 %v1046, %v1157
  %v1163 = vadd.f32 %v1047, %v1160
  %s1164 = scalar_lea.vmem %s5, 1
  %v1165 = vld [vmem:[%s1164] sm:$0x1]
  %v1166 = vmul.f32 %v1162, %v1162
  %v1167 = vmul.f32 %v1163, %v1163
  %v1168 = vsel %vm105, %v1166, 0.0
  %1169 = vadd.xlane.f32.xlu0 %v1168
  %v1170 = vpop.xlane.xlu0 %1169
  %v1171 = vsel %vm105, %v1167, 0.0
  %1172 = vadd.xlane.f32.xlu0 %v1171
  %v1173 = vpop.xlane.xlu0 %1172
  %v1174 = vmul.f32 %v1170, %v118
  %v1175 = vmul.f32 %v1173, %v118
  %v1176 = vadd.f32 %v1174, 1e-06
  %v1177 = vadd.f32 %v1175, 1e-06
  %v1178 = vrsqrt.pop %v1176
  %v1179 = vmul.f32 %v1178, %v1176
  %v1180 = vmul.f32 %v1179, %v1178
  %v1181 = vmul.f32 0.5, %v1180
  %v1182 = vsub.f32 1.5, %v1181
  %v1183 = vmul.f32 %v1178, %v1182
  %vm1184 = vweird.f32 %v1176
  %vm1185 = vweird.f32 %v1178
  %vm1186 = vmor %vm1184, %vm1185
  %v1187 = vsel %vm1186, %v1178, %v1183
  %v1188 = vrsqrt.pop %v1177
  %v1189 = vmul.f32 %v1188, %v1177
  %v1190 = vmul.f32 %v1189, %v1188
  %v1191 = vmul.f32 0.5, %v1190
  %v1192 = vsub.f32 1.5, %v1191
  %v1193 = vmul.f32 %v1188, %v1192
  %vm1194 = vweird.f32 %v1177
  %vm1195 = vweird.f32 %v1188
  %vm1196 = vmor %vm1194, %vm1195
  %v1197 = vsel %vm1196, %v1188, %v1193
  %v1198 = vmul.f32 %v1162, %v1187
  %v1199 = vmul.f32 %v1163, %v1197
  %v1201 = vperm.slane %v1165, 0
  %v1203 = vmul.f32 %v1198, %v1201
  %v1204 = vmul.f32 %v1199, %v1201
  %s1205 = scalar_lea.vmem %s6, 128
  %v1206 = vld [vmem:[%s1205] sm:$0xff]
  %v1207 = vld [vmem:[%s1205 + $0x8] sm:$0xff]
  %v1208 = vld [vmem:[%s1205 + $0x10] sm:$0xff]
  %v1209 = vld [vmem:[%s1205 + $0x18] sm:$0xff]
  %v1210 = vld [vmem:[%s1205 + $0x20] sm:$0xff]
  %v1211 = vld [vmem:[%s1205 + $0x28] sm:$0xff]
  %v1212 = vld [vmem:[%s1205 + $0x30] sm:$0xff]
  %v1213 = vld [vmem:[%s1205 + $0x38] sm:$0xff]
  %v1214 = vld [vmem:[%s1205 + $0x40] sm:$0xff]
  %v1215 = vld [vmem:[%s1205 + $0x48] sm:$0xff]
  %v1216 = vld [vmem:[%s1205 + $0x50] sm:$0xff]
  %v1217 = vld [vmem:[%s1205 + $0x58] sm:$0xff]
  %v1218 = vld [vmem:[%s1205 + $0x60] sm:$0xff]
  %v1219 = vld [vmem:[%s1205 + $0x68] sm:$0xff]
  %v1220 = vld [vmem:[%s1205 + $0x70] sm:$0xff]
  %v1221 = vld [vmem:[%s1205 + $0x78] sm:$0xff]
  %v1223 = vsel %vm105, %v1203, 0
  %1225 = vmatpush.msra.mxu0 0.0
  %1226 = vmatpush.msra.mxu0 0.0
  %1227 = vmatpush.msra.mxu0 0.0
  %1228 = vmatpush.msra.mxu0 0.0
  %1229 = vmatpush.msra.mxu0 0.0
  %1230 = vmatpush.msra.mxu0 0.0
  %1231 = vmatpush.msra.mxu0 0.0
  %1232 = vmatpush.msra.mxu0 0.0
  %1233 = vmatpush.msra.mxu0 0.0
  %1234 = vmatpush.msra.mxu0 0.0
  %1235 = vmatpush.msra.mxu0 0.0
  %1236 = vmatpush.msra.mxu0 0.0
  %1237 = vmatpush.msra.mxu0 %v1209
  %1238 = vmatpush.msra.mxu0 %v1208
  %1239 = vmatpush.msra.mxu0 %v1207
  %1240 = vmatpush.msra.mxu0 %v1206
  %1241 = vmatmul.f32.gmra.mxu0 %v1223
  %v1242 = vpop.f32.mrf.mxu0
  %v1243 = vadd.f32 0.0, %v1242
  %1244 = vdwg.mxu0
  %1245 = vmatpush.msra.mxu0 0.0
  %1246 = vmatpush.msra.mxu0 0.0
  %1247 = vmatpush.msra.mxu0 0.0
  %1248 = vmatpush.msra.mxu0 0.0
  %1249 = vmatpush.msra.mxu0 0.0
  %1250 = vmatpush.msra.mxu0 0.0
  %1251 = vmatpush.msra.mxu0 0.0
  %1252 = vmatpush.msra.mxu0 0.0
  %1253 = vmatpush.msra.mxu0 0.0
  %1254 = vmatpush.msra.mxu0 0.0
  %1255 = vmatpush.msra.mxu0 0.0
  %1256 = vmatpush.msra.mxu0 0.0
  %1257 = vmatpush.msra.mxu0 %v1213
  %1258 = vmatpush.msra.mxu0 %v1212
  %1259 = vmatpush.msra.mxu0 %v1211
  %1260 = vmatpush.msra.mxu0 %v1210
  %1261 = vmatmul.f32.gmra.mxu0 %v1223
  %v1262 = vpop.f32.mrf.mxu0
  %v1263 = vadd.f32 0.0, %v1262
  %1264 = vdwg.mxu0
  %1265 = vmatpush.msra.mxu0 0.0
  %1266 = vmatpush.msra.mxu0 0.0
  %1267 = vmatpush.msra.mxu0 0.0
  %1268 = vmatpush.msra.mxu0 0.0
  %1269 = vmatpush.msra.mxu0 0.0
  %1270 = vmatpush.msra.mxu0 0.0
  %1271 = vmatpush.msra.mxu0 0.0
  %1272 = vmatpush.msra.mxu0 0.0
  %1273 = vmatpush.msra.mxu0 0.0
  %1274 = vmatpush.msra.mxu0 0.0
  %1275 = vmatpush.msra.mxu0 0.0
  %1276 = vmatpush.msra.mxu0 0.0
  %1277 = vmatpush.msra.mxu0 %v1217
  %1278 = vmatpush.msra.mxu0 %v1216
  %1279 = vmatpush.msra.mxu0 %v1215
  %1280 = vmatpush.msra.mxu0 %v1214
  %1281 = vmatmul.f32.gmra.mxu0 %v1223
  %v1282 = vpop.f32.mrf.mxu0
  %v1283 = vadd.f32 0.0, %v1282
  %1284 = vdwg.mxu0
  %1285 = vmatpush.msra.mxu0 0.0
  %1286 = vmatpush.msra.mxu0 0.0
  %1287 = vmatpush.msra.mxu0 0.0
  %1288 = vmatpush.msra.mxu0 0.0
  %1289 = vmatpush.msra.mxu0 0.0
  %1290 = vmatpush.msra.mxu0 0.0
  %1291 = vmatpush.msra.mxu0 0.0
  %1292 = vmatpush.msra.mxu0 0.0
  %1293 = vmatpush.msra.mxu0 0.0
  %1294 = vmatpush.msra.mxu0 0.0
  %1295 = vmatpush.msra.mxu0 0.0
  %1296 = vmatpush.msra.mxu0 0.0
  %1297 = vmatpush.msra.mxu0 %v1221
  %1298 = vmatpush.msra.mxu0 %v1220
  %1299 = vmatpush.msra.mxu0 %v1219
  %1300 = vmatpush.msra.mxu0 %v1218
  %1301 = vmatmul.f32.gmra.mxu0 %v1223
  %v1302 = vpop.f32.mrf.mxu0
  %v1303 = vadd.f32 0.0, %v1302
  %1304 = vdwg.mxu0
  %v1306 = vsel %vm105, %v1204, 0
  %1308 = vmatpush.msra.mxu0 0.0
  %1309 = vmatpush.msra.mxu0 0.0
  %1310 = vmatpush.msra.mxu0 0.0
  %1311 = vmatpush.msra.mxu0 0.0
  %1312 = vmatpush.msra.mxu0 0.0
  %1313 = vmatpush.msra.mxu0 0.0
  %1314 = vmatpush.msra.mxu0 0.0
  %1315 = vmatpush.msra.mxu0 0.0
  %1316 = vmatpush.msra.mxu0 0.0
  %1317 = vmatpush.msra.mxu0 0.0
  %1318 = vmatpush.msra.mxu0 0.0
  %1319 = vmatpush.msra.mxu0 0.0
  %1320 = vmatpush.msra.mxu0 %v1209
  %1321 = vmatpush.msra.mxu0 %v1208
  %1322 = vmatpush.msra.mxu0 %v1207
  %1323 = vmatpush.msra.mxu0 %v1206
  %1324 = vmatmul.f32.gmra.mxu0 %v1306
  %v1325 = vpop.f32.mrf.mxu0
  %v1326 = vadd.f32 0.0, %v1325
  %1327 = vdwg.mxu0
  %1328 = vmatpush.msra.mxu0 0.0
  %1329 = vmatpush.msra.mxu0 0.0
  %1330 = vmatpush.msra.mxu0 0.0
  %1331 = vmatpush.msra.mxu0 0.0
  %1332 = vmatpush.msra.mxu0 0.0
  %1333 = vmatpush.msra.mxu0 0.0
  %1334 = vmatpush.msra.mxu0 0.0
  %1335 = vmatpush.msra.mxu0 0.0
  %1336 = vmatpush.msra.mxu0 0.0
  %1337 = vmatpush.msra.mxu0 0.0
  %1338 = vmatpush.msra.mxu0 0.0
  %1339 = vmatpush.msra.mxu0 0.0
  %1340 = vmatpush.msra.mxu0 %v1213
  %1341 = vmatpush.msra.mxu0 %v1212
  %1342 = vmatpush.msra.mxu0 %v1211
  %1343 = vmatpush.msra.mxu0 %v1210
  %1344 = vmatmul.f32.gmra.mxu0 %v1306
  %v1345 = vpop.f32.mrf.mxu0
  %v1346 = vadd.f32 0.0, %v1345
  %1347 = vdwg.mxu0
  %1348 = vmatpush.msra.mxu0 0.0
  %1349 = vmatpush.msra.mxu0 0.0
  %1350 = vmatpush.msra.mxu0 0.0
  %1351 = vmatpush.msra.mxu0 0.0
  %1352 = vmatpush.msra.mxu0 0.0
  %1353 = vmatpush.msra.mxu0 0.0
  %1354 = vmatpush.msra.mxu0 0.0
  %1355 = vmatpush.msra.mxu0 0.0
  %1356 = vmatpush.msra.mxu0 0.0
  %1357 = vmatpush.msra.mxu0 0.0
  %1358 = vmatpush.msra.mxu0 0.0
  %1359 = vmatpush.msra.mxu0 0.0
  %1360 = vmatpush.msra.mxu0 %v1217
  %1361 = vmatpush.msra.mxu0 %v1216
  %1362 = vmatpush.msra.mxu0 %v1215
  %1363 = vmatpush.msra.mxu0 %v1214
  %1364 = vmatmul.f32.gmra.mxu0 %v1306
  %v1365 = vpop.f32.mrf.mxu0
  %v1366 = vadd.f32 0.0, %v1365
  %1367 = vdwg.mxu0
  %1368 = vmatpush.msra.mxu0 0.0
  %1369 = vmatpush.msra.mxu0 0.0
  %1370 = vmatpush.msra.mxu0 0.0
  %1371 = vmatpush.msra.mxu0 0.0
  %1372 = vmatpush.msra.mxu0 0.0
  %1373 = vmatpush.msra.mxu0 0.0
  %1374 = vmatpush.msra.mxu0 0.0
  %1375 = vmatpush.msra.mxu0 0.0
  %1376 = vmatpush.msra.mxu0 0.0
  %1377 = vmatpush.msra.mxu0 0.0
  %1378 = vmatpush.msra.mxu0 0.0
  %1379 = vmatpush.msra.mxu0 0.0
  %1380 = vmatpush.msra.mxu0 %v1221
  %1381 = vmatpush.msra.mxu0 %v1220
  %1382 = vmatpush.msra.mxu0 %v1219
  %1383 = vmatpush.msra.mxu0 %v1218
  %1384 = vmatmul.f32.gmra.mxu0 %v1306
  %v1385 = vpop.f32.mrf.mxu0
  %v1386 = vadd.f32 0.0, %v1385
  %1387 = vdwg.mxu0
  %1389 = vrot.lane.b32.xlu0 %v1243, 120
  %v1390 = vpop.permute.xlu0 %1389
  %v1391 = vsel %vm72, %v1243, 0
  %v1393 = vsel %vm72, %v1390, 0
  %1395 = vmatpush.xpose.msra.mxu0 0.0
  %1396 = vmatpush.xpose.msra.mxu0 0.0
  %1397 = vmatpush.xpose.msra.mxu0 0.0
  %1398 = vmatpush.xpose.msra.mxu0 0.0
  %1399 = vmatpush.xpose.msra.mxu0 0.0
  %1400 = vmatpush.xpose.msra.mxu0 0.0
  %1401 = vmatpush.xpose.msra.mxu0 0.0
  %1402 = vmatpush.xpose.msra.mxu0 0.0
  %1403 = vmatpush.xpose.msra.mxu0 0.0
  %1404 = vmatpush.xpose.msra.mxu0 0.0
  %1405 = vmatpush.xpose.msra.mxu0 0.0
  %1406 = vmatpush.xpose.msra.mxu0 0.0
  %1407 = vmatpush.xpose.msra.mxu0 0.0
  %1408 = vmatpush.xpose.msra.mxu0 0.0
  %1409 = vmatpush.xpose.msra.mxu0 0.0
  %1410 = vmatpush.xpose.msra.mxu0 %v1393
  %1411 = vmatmul.f32.gmra.mxu0 %v1391
  %v1412 = vpop.f32.mrf.mxu0
  %v1413 = vadd.f32 %v57, %v1412
  %1414 = vdwg.mxu0
  %1416 = vrot.lane.b32.xlu0 %v1263, 120
  %v1417 = vpop.permute.xlu0 %1416
  %v1418 = vsel %vm72, %v1263, 0
  %v1420 = vsel %vm72, %v1417, 0
  %1422 = vmatpush.xpose.msra.mxu0 0.0
  %1423 = vmatpush.xpose.msra.mxu0 0.0
  %1424 = vmatpush.xpose.msra.mxu0 0.0
  %1425 = vmatpush.xpose.msra.mxu0 0.0
  %1426 = vmatpush.xpose.msra.mxu0 0.0
  %1427 = vmatpush.xpose.msra.mxu0 0.0
  %1428 = vmatpush.xpose.msra.mxu0 0.0
  %1429 = vmatpush.xpose.msra.mxu0 0.0
  %1430 = vmatpush.xpose.msra.mxu0 0.0
  %1431 = vmatpush.xpose.msra.mxu0 0.0
  %1432 = vmatpush.xpose.msra.mxu0 0.0
  %1433 = vmatpush.xpose.msra.mxu0 0.0
  %1434 = vmatpush.xpose.msra.mxu0 0.0
  %1435 = vmatpush.xpose.msra.mxu0 0.0
  %1436 = vmatpush.xpose.msra.mxu0 0.0
  %1437 = vmatpush.xpose.msra.mxu0 %v1420
  %1438 = vmatmul.f32.gmra.mxu0 %v1418
  %v1439 = vpop.f32.mrf.mxu0
  %v1440 = vadd.f32 %v58, %v1439
  %1441 = vdwg.mxu0
  %1443 = vrot.lane.b32.xlu0 %v1283, 120
  %v1444 = vpop.permute.xlu0 %1443
  %v1445 = vsel %vm72, %v1283, 0
  %v1447 = vsel %vm72, %v1444, 0
  %1449 = vmatpush.xpose.msra.mxu0 0.0
  %1450 = vmatpush.xpose.msra.mxu0 0.0
  %1451 = vmatpush.xpose.msra.mxu0 0.0
  %1452 = vmatpush.xpose.msra.mxu0 0.0
  %1453 = vmatpush.xpose.msra.mxu0 0.0
  %1454 = vmatpush.xpose.msra.mxu0 0.0
  %1455 = vmatpush.xpose.msra.mxu0 0.0
  %1456 = vmatpush.xpose.msra.mxu0 0.0
  %1457 = vmatpush.xpose.msra.mxu0 0.0
  %1458 = vmatpush.xpose.msra.mxu0 0.0
  %1459 = vmatpush.xpose.msra.mxu0 0.0
  %1460 = vmatpush.xpose.msra.mxu0 0.0
  %1461 = vmatpush.xpose.msra.mxu0 0.0
  %1462 = vmatpush.xpose.msra.mxu0 0.0
  %1463 = vmatpush.xpose.msra.mxu0 0.0
  %1464 = vmatpush.xpose.msra.mxu0 %v1447
  %1465 = vmatmul.f32.gmra.mxu0 %v1445
  %v1466 = vpop.f32.mrf.mxu0
  %v1467 = vadd.f32 %v59, %v1466
  %1468 = vdwg.mxu0
  %1470 = vrot.lane.b32.xlu0 %v1303, 120
  %v1471 = vpop.permute.xlu0 %1470
  %v1472 = vsel %vm72, %v1303, 0
  %v1474 = vsel %vm72, %v1471, 0
  %1476 = vmatpush.xpose.msra.mxu0 0.0
  %1477 = vmatpush.xpose.msra.mxu0 0.0
  %1478 = vmatpush.xpose.msra.mxu0 0.0
  %1479 = vmatpush.xpose.msra.mxu0 0.0
  %1480 = vmatpush.xpose.msra.mxu0 0.0
  %1481 = vmatpush.xpose.msra.mxu0 0.0
  %1482 = vmatpush.xpose.msra.mxu0 0.0
  %1483 = vmatpush.xpose.msra.mxu0 0.0
  %1484 = vmatpush.xpose.msra.mxu0 0.0
  %1485 = vmatpush.xpose.msra.mxu0 0.0
  %1486 = vmatpush.xpose.msra.mxu0 0.0
  %1487 = vmatpush.xpose.msra.mxu0 0.0
  %1488 = vmatpush.xpose.msra.mxu0 0.0
  %1489 = vmatpush.xpose.msra.mxu0 0.0
  %1490 = vmatpush.xpose.msra.mxu0 0.0
  %1491 = vmatpush.xpose.msra.mxu0 %v1474
  %1492 = vmatmul.f32.gmra.mxu0 %v1472
  %v1493 = vpop.f32.mrf.mxu0
  %v1494 = vadd.f32 %v60, %v1493
  %1495 = vdwg.mxu0
  %1497 = vrot.lane.b32.xlu0 %v1326, 120
  %v1498 = vpop.permute.xlu0 %1497
  %v1499 = vsel %vm72, %v1326, 0
  %v1501 = vsel %vm72, %v1498, 0
  %1503 = vmatpush.xpose.msra.mxu0 0.0
  %1504 = vmatpush.xpose.msra.mxu0 0.0
  %1505 = vmatpush.xpose.msra.mxu0 0.0
  %1506 = vmatpush.xpose.msra.mxu0 0.0
  %1507 = vmatpush.xpose.msra.mxu0 0.0
  %1508 = vmatpush.xpose.msra.mxu0 0.0
  %1509 = vmatpush.xpose.msra.mxu0 0.0
  %1510 = vmatpush.xpose.msra.mxu0 0.0
  %1511 = vmatpush.xpose.msra.mxu0 0.0
  %1512 = vmatpush.xpose.msra.mxu0 0.0
  %1513 = vmatpush.xpose.msra.mxu0 0.0
  %1514 = vmatpush.xpose.msra.mxu0 0.0
  %1515 = vmatpush.xpose.msra.mxu0 0.0
  %1516 = vmatpush.xpose.msra.mxu0 0.0
  %1517 = vmatpush.xpose.msra.mxu0 0.0
  %1518 = vmatpush.xpose.msra.mxu0 %v1501
  %1519 = vmatmul.f32.gmra.mxu0 %v1499
  %v1520 = vpop.f32.mrf.mxu0
  %v1521 = vadd.f32 %v61, %v1520
  %1522 = vdwg.mxu0
  %1524 = vrot.lane.b32.xlu0 %v1346, 120
  %v1525 = vpop.permute.xlu0 %1524
  %v1526 = vsel %vm72, %v1346, 0
  %v1528 = vsel %vm72, %v1525, 0
  %1530 = vmatpush.xpose.msra.mxu0 0.0
  %1531 = vmatpush.xpose.msra.mxu0 0.0
  %1532 = vmatpush.xpose.msra.mxu0 0.0
  %1533 = vmatpush.xpose.msra.mxu0 0.0
  %1534 = vmatpush.xpose.msra.mxu0 0.0
  %1535 = vmatpush.xpose.msra.mxu0 0.0
  %1536 = vmatpush.xpose.msra.mxu0 0.0
  %1537 = vmatpush.xpose.msra.mxu0 0.0
  %1538 = vmatpush.xpose.msra.mxu0 0.0
  %1539 = vmatpush.xpose.msra.mxu0 0.0
  %1540 = vmatpush.xpose.msra.mxu0 0.0
  %1541 = vmatpush.xpose.msra.mxu0 0.0
  %1542 = vmatpush.xpose.msra.mxu0 0.0
  %1543 = vmatpush.xpose.msra.mxu0 0.0
  %1544 = vmatpush.xpose.msra.mxu0 0.0
  %1545 = vmatpush.xpose.msra.mxu0 %v1528
  %1546 = vmatmul.f32.gmra.mxu0 %v1526
  %v1547 = vpop.f32.mrf.mxu0
  %v1548 = vadd.f32 %v62, %v1547
  %1549 = vdwg.mxu0
  %1551 = vrot.lane.b32.xlu0 %v1366, 120
  %v1552 = vpop.permute.xlu0 %1551
  %v1553 = vsel %vm72, %v1366, 0
  %v1555 = vsel %vm72, %v1552, 0
  %1557 = vmatpush.xpose.msra.mxu0 0.0
  %1558 = vmatpush.xpose.msra.mxu0 0.0
  %1559 = vmatpush.xpose.msra.mxu0 0.0
  %1560 = vmatpush.xpose.msra.mxu0 0.0
  %1561 = vmatpush.xpose.msra.mxu0 0.0
  %1562 = vmatpush.xpose.msra.mxu0 0.0
  %1563 = vmatpush.xpose.msra.mxu0 0.0
  %1564 = vmatpush.xpose.msra.mxu0 0.0
  %1565 = vmatpush.xpose.msra.mxu0 0.0
  %1566 = vmatpush.xpose.msra.mxu0 0.0
  %1567 = vmatpush.xpose.msra.mxu0 0.0
  %1568 = vmatpush.xpose.msra.mxu0 0.0
  %1569 = vmatpush.xpose.msra.mxu0 0.0
  %1570 = vmatpush.xpose.msra.mxu0 0.0
  %1571 = vmatpush.xpose.msra.mxu0 0.0
  %1572 = vmatpush.xpose.msra.mxu0 %v1555
  %1573 = vmatmul.f32.gmra.mxu0 %v1553
  %v1574 = vpop.f32.mrf.mxu0
  %v1575 = vadd.f32 %v63, %v1574
  %1576 = vdwg.mxu0
  %1578 = vrot.lane.b32.xlu0 %v1386, 120
  %v1579 = vpop.permute.xlu0 %1578
  %v1580 = vsel %vm72, %v1386, 0
  %v1582 = vsel %vm72, %v1579, 0
  %1584 = vmatpush.xpose.msra.mxu0 0.0
  %1585 = vmatpush.xpose.msra.mxu0 0.0
  %1586 = vmatpush.xpose.msra.mxu0 0.0
  %1587 = vmatpush.xpose.msra.mxu0 0.0
  %1588 = vmatpush.xpose.msra.mxu0 0.0
  %1589 = vmatpush.xpose.msra.mxu0 0.0
  %1590 = vmatpush.xpose.msra.mxu0 0.0
  %1591 = vmatpush.xpose.msra.mxu0 0.0
  %1592 = vmatpush.xpose.msra.mxu0 0.0
  %1593 = vmatpush.xpose.msra.mxu0 0.0
  %1594 = vmatpush.xpose.msra.mxu0 0.0
  %1595 = vmatpush.xpose.msra.mxu0 0.0
  %1596 = vmatpush.xpose.msra.mxu0 0.0
  %1597 = vmatpush.xpose.msra.mxu0 0.0
  %1598 = vmatpush.xpose.msra.mxu0 0.0
  %1599 = vmatpush.xpose.msra.mxu0 %v1582
  %1600 = vmatmul.f32.gmra.mxu0 %v1580
  %v1601 = vpop.f32.mrf.mxu0
  %v1602 = vadd.f32 %v64, %v1601
  %1603 = vdwg.mxu0
  %v1604 = vsel %vm72, %v1413, -inf
  %1605 = vmax.xlane.f32.xlu0 %v1604
  %v1606 = vpop.xlane.xlu0 %1605
  %v1607 = vsel %vm72, %v1440, -inf
  %1608 = vmax.xlane.f32.xlu0 %v1607
  %v1609 = vpop.xlane.xlu0 %1608
  %v1610 = vsel %vm72, %v1467, -inf
  %1611 = vmax.xlane.f32.xlu0 %v1610
  %v1612 = vpop.xlane.xlu0 %1611
  %v1613 = vsel %vm72, %v1494, -inf
  %1614 = vmax.xlane.f32.xlu0 %v1613
  %v1615 = vpop.xlane.xlu0 %1614
  %v1616 = vsel %vm72, %v1521, -inf
  %1617 = vmax.xlane.f32.xlu0 %v1616
  %v1618 = vpop.xlane.xlu0 %1617
  %v1619 = vsel %vm72, %v1548, -inf
  %1620 = vmax.xlane.f32.xlu0 %v1619
  %v1621 = vpop.xlane.xlu0 %1620
  %v1622 = vsel %vm72, %v1575, -inf
  %1623 = vmax.xlane.f32.xlu0 %v1622
  %v1624 = vpop.xlane.xlu0 %1623
  %v1625 = vsel %vm72, %v1602, -inf
  %1626 = vmax.xlane.f32.xlu0 %v1625
  %v1627 = vpop.xlane.xlu0 %1626
  %v1628 = vsub.f32 %v1413, %v1606
  %v1629 = vsub.f32 %v1440, %v1609
  %v1630 = vsub.f32 %v1467, %v1612
  %v1631 = vsub.f32 %v1494, %v1615
  %v1632 = vsub.f32 %v1521, %v1618
  %v1633 = vsub.f32 %v1548, %v1621
  %v1634 = vsub.f32 %v1575, %v1624
  %v1635 = vsub.f32 %v1602, %v1627
  %v1636 = vmul.f32 %v1628, 1.442695
  %v1637 = vpow.pop %v1636
  %v1638 = vmul.f32 %v1629, 1.442695
  %v1639 = vpow.pop %v1638
  %v1640 = vmul.f32 %v1630, 1.442695
  %v1641 = vpow.pop %v1640
  %v1642 = vmul.f32 %v1631, 1.442695
  %v1643 = vpow.pop %v1642
  %v1644 = vmul.f32 %v1632, 1.442695
  %v1645 = vpow.pop %v1644
  %v1646 = vmul.f32 %v1633, 1.442695
  %v1647 = vpow.pop %v1646
  %v1648 = vmul.f32 %v1634, 1.442695
  %v1649 = vpow.pop %v1648
  %v1650 = vmul.f32 %v1635, 1.442695
  %v1651 = vpow.pop %v1650
  %v1652 = vsel %vm72, %v1637, 0.0
  %1653 = vadd.xlane.f32.xlu0 %v1652
  %v1654 = vpop.xlane.xlu0 %1653
  %v1655 = vsel %vm72, %v1639, 0.0
  %1656 = vadd.xlane.f32.xlu0 %v1655
  %v1657 = vpop.xlane.xlu0 %1656
  %v1658 = vsel %vm72, %v1641, 0.0
  %1659 = vadd.xlane.f32.xlu0 %v1658
  %v1660 = vpop.xlane.xlu0 %1659
  %v1661 = vsel %vm72, %v1643, 0.0
  %1662 = vadd.xlane.f32.xlu0 %v1661
  %v1663 = vpop.xlane.xlu0 %1662
  %v1664 = vsel %vm72, %v1645, 0.0
  %1665 = vadd.xlane.f32.xlu0 %v1664
  %v1666 = vpop.xlane.xlu0 %1665
  %v1667 = vsel %vm72, %v1647, 0.0
  %1668 = vadd.xlane.f32.xlu0 %v1667
  %v1669 = vpop.xlane.xlu0 %1668
  %v1670 = vsel %vm72, %v1649, 0.0
  %1671 = vadd.xlane.f32.xlu0 %v1670
  %v1672 = vpop.xlane.xlu0 %1671
  %v1673 = vsel %vm72, %v1651, 0.0
  %1674 = vadd.xlane.f32.xlu0 %v1673
  %v1675 = vpop.xlane.xlu0 %1674
  %v1676 = vrcp.pop %v1654
  %v1677 = vrcp.pop %v1657
  %v1678 = vrcp.pop %v1660
  %v1679 = vrcp.pop %v1663
  %v1680 = vrcp.pop %v1666
  %v1681 = vrcp.pop %v1669
  %v1682 = vrcp.pop %v1672
  %v1683 = vrcp.pop %v1675
  %v1684 = vmul.f32 %v1637, %v1676
  %v1685 = vmul.f32 %v1639, %v1677
  %v1686 = vmul.f32 %v1641, %v1678
  %v1687 = vmul.f32 %v1643, %v1679
  %v1688 = vmul.f32 %v1645, %v1680
  %v1689 = vmul.f32 %v1647, %v1681
  %v1690 = vmul.f32 %v1649, %v1682
  %v1691 = vmul.f32 %v1651, %v1683
  %1692 = vrot.lane.b32.xlu0 %v1243, 112
  %v1693 = vpop.permute.xlu0 %1692
  %v1696 = vsel %vm72, %v1684, 0
  %1698 = vmatpush.msra.mxu0 0.0
  %1699 = vmatpush.msra.mxu0 0.0
  %1700 = vmatpush.msra.mxu0 0.0
  %1701 = vmatpush.msra.mxu0 0.0
  %1702 = vmatpush.msra.mxu0 0.0
  %1703 = vmatpush.msra.mxu0 0.0
  %1704 = vmatpush.msra.mxu0 0.0
  %1705 = vmatpush.msra.mxu0 0.0
  %1706 = vmatpush.msra.mxu0 0.0
  %1707 = vmatpush.msra.mxu0 0.0
  %1708 = vmatpush.msra.mxu0 0.0
  %1709 = vmatpush.msra.mxu0 0.0
  %1710 = vmatpush.msra.mxu0 0.0
  %1711 = vmatpush.msra.mxu0 0.0
  %1712 = vmatpush.msra.mxu0 0.0
  %1713 = vmatpush.msra.mxu0 %v1693
  %1714 = vmatmul.f32.gmra.mxu0 %v1696
  %v1715 = vpop.f32.mrf.mxu0
  %v1716 = vadd.f32 0.0, %v1715
  %1717 = vdwg.mxu0
  %1718 = vrot.lane.b32.xlu0 %v1263, 112
  %v1719 = vpop.permute.xlu0 %1718
  %v1722 = vsel %vm72, %v1685, 0
  %1724 = vmatpush.msra.mxu0 0.0
  %1725 = vmatpush.msra.mxu0 0.0
  %1726 = vmatpush.msra.mxu0 0.0
  %1727 = vmatpush.msra.mxu0 0.0
  %1728 = vmatpush.msra.mxu0 0.0
  %1729 = vmatpush.msra.mxu0 0.0
  %1730 = vmatpush.msra.mxu0 0.0
  %1731 = vmatpush.msra.mxu0 0.0
  %1732 = vmatpush.msra.mxu0 0.0
  %1733 = vmatpush.msra.mxu0 0.0
  %1734 = vmatpush.msra.mxu0 0.0
  %1735 = vmatpush.msra.mxu0 0.0
  %1736 = vmatpush.msra.mxu0 0.0
  %1737 = vmatpush.msra.mxu0 0.0
  %1738 = vmatpush.msra.mxu0 0.0
  %1739 = vmatpush.msra.mxu0 %v1719
  %1740 = vmatmul.f32.gmra.mxu0 %v1722
  %v1741 = vpop.f32.mrf.mxu0
  %v1742 = vadd.f32 0.0, %v1741
  %1743 = vdwg.mxu0
  %1744 = vrot.lane.b32.xlu0 %v1283, 112
  %v1745 = vpop.permute.xlu0 %1744
  %v1748 = vsel %vm72, %v1686, 0
  %1750 = vmatpush.msra.mxu0 0.0
  %1751 = vmatpush.msra.mxu0 0.0
  %1752 = vmatpush.msra.mxu0 0.0
  %1753 = vmatpush.msra.mxu0 0.0
  %1754 = vmatpush.msra.mxu0 0.0
  %1755 = vmatpush.msra.mxu0 0.0
  %1756 = vmatpush.msra.mxu0 0.0
  %1757 = vmatpush.msra.mxu0 0.0
  %1758 = vmatpush.msra.mxu0 0.0
  %1759 = vmatpush.msra.mxu0 0.0
  %1760 = vmatpush.msra.mxu0 0.0
  %1761 = vmatpush.msra.mxu0 0.0
  %1762 = vmatpush.msra.mxu0 0.0
  %1763 = vmatpush.msra.mxu0 0.0
  %1764 = vmatpush.msra.mxu0 0.0
  %1765 = vmatpush.msra.mxu0 %v1745
  %1766 = vmatmul.f32.gmra.mxu0 %v1748
  %v1767 = vpop.f32.mrf.mxu0
  %v1768 = vadd.f32 0.0, %v1767
  %1769 = vdwg.mxu0
  %1770 = vrot.lane.b32.xlu0 %v1303, 112
  %v1771 = vpop.permute.xlu0 %1770
  %v1774 = vsel %vm72, %v1687, 0
  %1776 = vmatpush.msra.mxu0 0.0
  %1777 = vmatpush.msra.mxu0 0.0
  %1778 = vmatpush.msra.mxu0 0.0
  %1779 = vmatpush.msra.mxu0 0.0
  %1780 = vmatpush.msra.mxu0 0.0
  %1781 = vmatpush.msra.mxu0 0.0
  %1782 = vmatpush.msra.mxu0 0.0
  %1783 = vmatpush.msra.mxu0 0.0
  %1784 = vmatpush.msra.mxu0 0.0
  %1785 = vmatpush.msra.mxu0 0.0
  %1786 = vmatpush.msra.mxu0 0.0
  %1787 = vmatpush.msra.mxu0 0.0
  %1788 = vmatpush.msra.mxu0 0.0
  %1789 = vmatpush.msra.mxu0 0.0
  %1790 = vmatpush.msra.mxu0 0.0
  %1791 = vmatpush.msra.mxu0 %v1771
  %1792 = vmatmul.f32.gmra.mxu0 %v1774
  %v1793 = vpop.f32.mrf.mxu0
  %v1794 = vadd.f32 0.0, %v1793
  %1795 = vdwg.mxu0
  %1796 = vrot.lane.b32.xlu0 %v1326, 112
  %v1797 = vpop.permute.xlu0 %1796
  %v1800 = vsel %vm72, %v1688, 0
  %1802 = vmatpush.msra.mxu0 0.0
  %1803 = vmatpush.msra.mxu0 0.0
  %1804 = vmatpush.msra.mxu0 0.0
  %1805 = vmatpush.msra.mxu0 0.0
  %1806 = vmatpush.msra.mxu0 0.0
  %1807 = vmatpush.msra.mxu0 0.0
  %1808 = vmatpush.msra.mxu0 0.0
  %1809 = vmatpush.msra.mxu0 0.0
  %1810 = vmatpush.msra.mxu0 0.0
  %1811 = vmatpush.msra.mxu0 0.0
  %1812 = vmatpush.msra.mxu0 0.0
  %1813 = vmatpush.msra.mxu0 0.0
  %1814 = vmatpush.msra.mxu0 0.0
  %1815 = vmatpush.msra.mxu0 0.0
  %1816 = vmatpush.msra.mxu0 0.0
  %1817 = vmatpush.msra.mxu0 %v1797
  %1818 = vmatmul.f32.gmra.mxu0 %v1800
  %v1819 = vpop.f32.mrf.mxu0
  %v1820 = vadd.f32 0.0, %v1819
  %1821 = vdwg.mxu0
  %1822 = vrot.lane.b32.xlu0 %v1346, 112
  %v1823 = vpop.permute.xlu0 %1822
  %v1826 = vsel %vm72, %v1689, 0
  %1828 = vmatpush.msra.mxu0 0.0
  %1829 = vmatpush.msra.mxu0 0.0
  %1830 = vmatpush.msra.mxu0 0.0
  %1831 = vmatpush.msra.mxu0 0.0
  %1832 = vmatpush.msra.mxu0 0.0
  %1833 = vmatpush.msra.mxu0 0.0
  %1834 = vmatpush.msra.mxu0 0.0
  %1835 = vmatpush.msra.mxu0 0.0
  %1836 = vmatpush.msra.mxu0 0.0
  %1837 = vmatpush.msra.mxu0 0.0
  %1838 = vmatpush.msra.mxu0 0.0
  %1839 = vmatpush.msra.mxu0 0.0
  %1840 = vmatpush.msra.mxu0 0.0
  %1841 = vmatpush.msra.mxu0 0.0
  %1842 = vmatpush.msra.mxu0 0.0
  %1843 = vmatpush.msra.mxu0 %v1823
  %1844 = vmatmul.f32.gmra.mxu0 %v1826
  %v1845 = vpop.f32.mrf.mxu0
  %v1846 = vadd.f32 0.0, %v1845
  %1847 = vdwg.mxu0
  %1848 = vrot.lane.b32.xlu0 %v1366, 112
  %v1849 = vpop.permute.xlu0 %1848
  %v1852 = vsel %vm72, %v1690, 0
  %1854 = vmatpush.msra.mxu0 0.0
  %1855 = vmatpush.msra.mxu0 0.0
  %1856 = vmatpush.msra.mxu0 0.0
  %1857 = vmatpush.msra.mxu0 0.0
  %1858 = vmatpush.msra.mxu0 0.0
  %1859 = vmatpush.msra.mxu0 0.0
  %1860 = vmatpush.msra.mxu0 0.0
  %1861 = vmatpush.msra.mxu0 0.0
  %1862 = vmatpush.msra.mxu0 0.0
  %1863 = vmatpush.msra.mxu0 0.0
  %1864 = vmatpush.msra.mxu0 0.0
  %1865 = vmatpush.msra.mxu0 0.0
  %1866 = vmatpush.msra.mxu0 0.0
  %1867 = vmatpush.msra.mxu0 0.0
  %1868 = vmatpush.msra.mxu0 0.0
  %1869 = vmatpush.msra.mxu0 %v1849
  %1870 = vmatmul.f32.gmra.mxu0 %v1852
  %v1871 = vpop.f32.mrf.mxu0
  %v1872 = vadd.f32 0.0, %v1871
  %1873 = vdwg.mxu0
  %1874 = vrot.lane.b32.xlu0 %v1386, 112
  %v1875 = vpop.permute.xlu0 %1874
  %v1878 = vsel %vm72, %v1691, 0
  %1880 = vmatpush.msra.mxu0 0.0
  %1881 = vmatpush.msra.mxu0 0.0
  %1882 = vmatpush.msra.mxu0 0.0
  %1883 = vmatpush.msra.mxu0 0.0
  %1884 = vmatpush.msra.mxu0 0.0
  %1885 = vmatpush.msra.mxu0 0.0
  %1886 = vmatpush.msra.mxu0 0.0
  %1887 = vmatpush.msra.mxu0 0.0
  %1888 = vmatpush.msra.mxu0 0.0
  %1889 = vmatpush.msra.mxu0 0.0
  %1890 = vmatpush.msra.mxu0 0.0
  %1891 = vmatpush.msra.mxu0 0.0
  %1892 = vmatpush.msra.mxu0 0.0
  %1893 = vmatpush.msra.mxu0 0.0
  %1894 = vmatpush.msra.mxu0 0.0
  %1895 = vmatpush.msra.mxu0 %v1875
  %1896 = vmatmul.f32.gmra.mxu0 %v1878
  %v1897 = vpop.f32.mrf.mxu0
  %v1898 = vadd.f32 0.0, %v1897
  %1899 = vdwg.mxu0
  %s1900 = scalar_lea.vmem %s7, 32
  %v1901 = vld [vmem:[%s1900] sm:$0xff]
  %v1902 = vld [vmem:[%s1900 + $0x8] sm:$0xff]
  %v1903 = vld [vmem:[%s1900 + $0x10] sm:$0xff]
  %v1904 = vld [vmem:[%s1900 + $0x18] sm:$0xff]
  %v1906 = vsel %vm72, %v1716, 0
  %1908 = vmatpush.msra.mxu0 0.0
  %1909 = vmatpush.msra.mxu0 0.0
  %1910 = vmatpush.msra.mxu0 0.0
  %1911 = vmatpush.msra.mxu0 0.0
  %1912 = vmatpush.msra.mxu0 0.0
  %1913 = vmatpush.msra.mxu0 0.0
  %1914 = vmatpush.msra.mxu0 0.0
  %1915 = vmatpush.msra.mxu0 0.0
  %1916 = vmatpush.msra.mxu0 0.0
  %1917 = vmatpush.msra.mxu0 0.0
  %1918 = vmatpush.msra.mxu0 0.0
  %1919 = vmatpush.msra.mxu0 0.0
  %1920 = vmatpush.msra.mxu0 0.0
  %1921 = vmatpush.msra.mxu0 0.0
  %1922 = vmatpush.msra.mxu0 0.0
  %1923 = vmatpush.msra.mxu0 %v1901
  %1924 = vmatmul.f32.gmra.mxu0 %v1906
  %v1925 = vpop.f32.mrf.mxu0
  %v1926 = vadd.f32 0.0, %v1925
  %1927 = vdwg.mxu0
  %v1929 = vsel %vm72, %v1742, 0
  %1931 = vmatpush.msra.mxu0 0.0
  %1932 = vmatpush.msra.mxu0 0.0
  %1933 = vmatpush.msra.mxu0 0.0
  %1934 = vmatpush.msra.mxu0 0.0
  %1935 = vmatpush.msra.mxu0 0.0
  %1936 = vmatpush.msra.mxu0 0.0
  %1937 = vmatpush.msra.mxu0 0.0
  %1938 = vmatpush.msra.mxu0 0.0
  %1939 = vmatpush.msra.mxu0 0.0
  %1940 = vmatpush.msra.mxu0 0.0
  %1941 = vmatpush.msra.mxu0 0.0
  %1942 = vmatpush.msra.mxu0 0.0
  %1943 = vmatpush.msra.mxu0 0.0
  %1944 = vmatpush.msra.mxu0 0.0
  %1945 = vmatpush.msra.mxu0 0.0
  %1946 = vmatpush.msra.mxu0 %v1902
  %1947 = vmatmul.f32.gmra.mxu0 %v1929
  %v1948 = vpop.f32.mrf.mxu0
  %v1949 = vadd.f32 0.0, %v1948
  %1950 = vdwg.mxu0
  %v1952 = vsel %vm72, %v1768, 0
  %1954 = vmatpush.msra.mxu0 0.0
  %1955 = vmatpush.msra.mxu0 0.0
  %1956 = vmatpush.msra.mxu0 0.0
  %1957 = vmatpush.msra.mxu0 0.0
  %1958 = vmatpush.msra.mxu0 0.0
  %1959 = vmatpush.msra.mxu0 0.0
  %1960 = vmatpush.msra.mxu0 0.0
  %1961 = vmatpush.msra.mxu0 0.0
  %1962 = vmatpush.msra.mxu0 0.0
  %1963 = vmatpush.msra.mxu0 0.0
  %1964 = vmatpush.msra.mxu0 0.0
  %1965 = vmatpush.msra.mxu0 0.0
  %1966 = vmatpush.msra.mxu0 0.0
  %1967 = vmatpush.msra.mxu0 0.0
  %1968 = vmatpush.msra.mxu0 0.0
  %1969 = vmatpush.msra.mxu0 %v1903
  %1970 = vmatmul.f32.gmra.mxu0 %v1952
  %v1971 = vpop.f32.mrf.mxu0
  %v1972 = vadd.f32 0.0, %v1971
  %1973 = vdwg.mxu0
  %v1975 = vsel %vm72, %v1794, 0
  %1977 = vmatpush.msra.mxu0 0.0
  %1978 = vmatpush.msra.mxu0 0.0
  %1979 = vmatpush.msra.mxu0 0.0
  %1980 = vmatpush.msra.mxu0 0.0
  %1981 = vmatpush.msra.mxu0 0.0
  %1982 = vmatpush.msra.mxu0 0.0
  %1983 = vmatpush.msra.mxu0 0.0
  %1984 = vmatpush.msra.mxu0 0.0
  %1985 = vmatpush.msra.mxu0 0.0
  %1986 = vmatpush.msra.mxu0 0.0
  %1987 = vmatpush.msra.mxu0 0.0
  %1988 = vmatpush.msra.mxu0 0.0
  %1989 = vmatpush.msra.mxu0 0.0
  %1990 = vmatpush.msra.mxu0 0.0
  %1991 = vmatpush.msra.mxu0 0.0
  %1992 = vmatpush.msra.mxu0 %v1904
  %1993 = vmatmul.f32.gmra.mxu0 %v1975
  %v1994 = vpop.f32.mrf.mxu0
  %v1995 = vadd.f32 0.0, %v1994
  %1996 = vdwg.mxu0
  %v1998 = vsel %vm72, %v1820, 0
  %2000 = vmatpush.msra.mxu0 0.0
  %2001 = vmatpush.msra.mxu0 0.0
  %2002 = vmatpush.msra.mxu0 0.0
  %2003 = vmatpush.msra.mxu0 0.0
  %2004 = vmatpush.msra.mxu0 0.0
  %2005 = vmatpush.msra.mxu0 0.0
  %2006 = vmatpush.msra.mxu0 0.0
  %2007 = vmatpush.msra.mxu0 0.0
  %2008 = vmatpush.msra.mxu0 0.0
  %2009 = vmatpush.msra.mxu0 0.0
  %2010 = vmatpush.msra.mxu0 0.0
  %2011 = vmatpush.msra.mxu0 0.0
  %2012 = vmatpush.msra.mxu0 0.0
  %2013 = vmatpush.msra.mxu0 0.0
  %2014 = vmatpush.msra.mxu0 0.0
  %2015 = vmatpush.msra.mxu0 %v1901
  %2016 = vmatmul.f32.gmra.mxu0 %v1998
  %v2017 = vpop.f32.mrf.mxu0
  %v2018 = vadd.f32 0.0, %v2017
  %2019 = vdwg.mxu0
  %v2021 = vsel %vm72, %v1846, 0
  %2023 = vmatpush.msra.mxu0 0.0
  %2024 = vmatpush.msra.mxu0 0.0
  %2025 = vmatpush.msra.mxu0 0.0
  %2026 = vmatpush.msra.mxu0 0.0
  %2027 = vmatpush.msra.mxu0 0.0
  %2028 = vmatpush.msra.mxu0 0.0
  %2029 = vmatpush.msra.mxu0 0.0
  %2030 = vmatpush.msra.mxu0 0.0
  %2031 = vmatpush.msra.mxu0 0.0
  %2032 = vmatpush.msra.mxu0 0.0
  %2033 = vmatpush.msra.mxu0 0.0
  %2034 = vmatpush.msra.mxu0 0.0
  %2035 = vmatpush.msra.mxu0 0.0
  %2036 = vmatpush.msra.mxu0 0.0
  %2037 = vmatpush.msra.mxu0 0.0
  %2038 = vmatpush.msra.mxu0 %v1902
  %2039 = vmatmul.f32.gmra.mxu0 %v2021
  %v2040 = vpop.f32.mrf.mxu0
  %v2041 = vadd.f32 0.0, %v2040
  %2042 = vdwg.mxu0
  %v2044 = vsel %vm72, %v1872, 0
  %2046 = vmatpush.msra.mxu0 0.0
  %2047 = vmatpush.msra.mxu0 0.0
  %2048 = vmatpush.msra.mxu0 0.0
  %2049 = vmatpush.msra.mxu0 0.0
  %2050 = vmatpush.msra.mxu0 0.0
  %2051 = vmatpush.msra.mxu0 0.0
  %2052 = vmatpush.msra.mxu0 0.0
  %2053 = vmatpush.msra.mxu0 0.0
  %2054 = vmatpush.msra.mxu0 0.0
  %2055 = vmatpush.msra.mxu0 0.0
  %2056 = vmatpush.msra.mxu0 0.0
  %2057 = vmatpush.msra.mxu0 0.0
  %2058 = vmatpush.msra.mxu0 0.0
  %2059 = vmatpush.msra.mxu0 0.0
  %2060 = vmatpush.msra.mxu0 0.0
  %2061 = vmatpush.msra.mxu0 %v1903
  %2062 = vmatmul.f32.gmra.mxu0 %v2044
  %v2063 = vpop.f32.mrf.mxu0
  %v2064 = vadd.f32 0.0, %v2063
  %2065 = vdwg.mxu0
  %v2067 = vsel %vm72, %v1898, 0
  %2069 = vmatpush.msra.mxu0 0.0
  %2070 = vmatpush.msra.mxu0 0.0
  %2071 = vmatpush.msra.mxu0 0.0
  %2072 = vmatpush.msra.mxu0 0.0
  %2073 = vmatpush.msra.mxu0 0.0
  %2074 = vmatpush.msra.mxu0 0.0
  %2075 = vmatpush.msra.mxu0 0.0
  %2076 = vmatpush.msra.mxu0 0.0
  %2077 = vmatpush.msra.mxu0 0.0
  %2078 = vmatpush.msra.mxu0 0.0
  %2079 = vmatpush.msra.mxu0 0.0
  %2080 = vmatpush.msra.mxu0 0.0
  %2081 = vmatpush.msra.mxu0 0.0
  %2082 = vmatpush.msra.mxu0 0.0
  %2083 = vmatpush.msra.mxu0 0.0
  %2084 = vmatpush.msra.mxu0 %v1904
  %2085 = vmatmul.f32.gmra.mxu0 %v2067
  %v2086 = vpop.f32.mrf.mxu0
  %v2087 = vadd.f32 0.0, %v2086
  %2088 = vdwg.mxu0
  %v2089 = vsel %vm105, %v1926, 0.0
  %v2090 = vsel %vm105, %v1949, 0.0
  %v2091 = vadd.f32 %v2089, %v2090
  %v2092 = vsel %vm105, %v1972, 0.0
  %v2093 = vadd.f32 %v2091, %v2092
  %v2094 = vsel %vm105, %v1995, 0.0
  %v2095 = vadd.f32 %v2093, %v2094
  %v2096 = vsel %vm105, %v2018, 0.0
  %v2097 = vsel %vm105, %v2041, 0.0
  %v2098 = vadd.f32 %v2096, %v2097
  %v2099 = vsel %vm105, %v2064, 0.0
  %v2100 = vadd.f32 %v2098, %v2099
  %v2101 = vsel %vm105, %v2087, 0.0
  %v2102 = vadd.f32 %v2100, %v2101
  %v2103 = vadd.f32 %v1162, %v2095
  %v2104 = vadd.f32 %v1163, %v2102
  %s2105 = scalar_lea.vmem %s8, 1
  %v2106 = vld [vmem:[%s2105] sm:$0x1]
  %v2107 = vmul.f32 %v2103, %v2103
  %v2108 = vmul.f32 %v2104, %v2104
  %v2109 = vsel %vm105, %v2107, 0.0
  %2110 = vadd.xlane.f32.xlu0 %v2109
  %v2111 = vpop.xlane.xlu0 %2110
  %v2112 = vsel %vm105, %v2108, 0.0
  %2113 = vadd.xlane.f32.xlu0 %v2112
  %v2114 = vpop.xlane.xlu0 %2113
  %v2115 = vmul.f32 %v2111, %v118
  %v2116 = vmul.f32 %v2114, %v118
  %v2117 = vadd.f32 %v2115, 1e-06
  %v2118 = vadd.f32 %v2116, 1e-06
  %v2119 = vrsqrt.pop %v2117
  %v2120 = vmul.f32 %v2119, %v2117
  %v2121 = vmul.f32 %v2120, %v2119
  %v2122 = vmul.f32 0.5, %v2121
  %v2123 = vsub.f32 1.5, %v2122
  %v2124 = vmul.f32 %v2119, %v2123
  %vm2125 = vweird.f32 %v2117
  %vm2126 = vweird.f32 %v2119
  %vm2127 = vmor %vm2125, %vm2126
  %v2128 = vsel %vm2127, %v2119, %v2124
  %v2129 = vrsqrt.pop %v2118
  %v2130 = vmul.f32 %v2129, %v2118
  %v2131 = vmul.f32 %v2130, %v2129
  %v2132 = vmul.f32 0.5, %v2131
  %v2133 = vsub.f32 1.5, %v2132
  %v2134 = vmul.f32 %v2129, %v2133
  %vm2135 = vweird.f32 %v2118
  %vm2136 = vweird.f32 %v2129
  %vm2137 = vmor %vm2135, %vm2136
  %v2138 = vsel %vm2137, %v2129, %v2134
  %v2139 = vmul.f32 %v2103, %v2128
  %v2140 = vmul.f32 %v2104, %v2138
  %v2142 = vperm.slane %v2106, 0
  %v2144 = vmul.f32 %v2139, %v2142
  %v2145 = vmul.f32 %v2140, %v2142
  %s2146 = scalar_lea.vmem %s9, 32
  %v2147 = vld [vmem:[%s2146] sm:$0xff]
  %v2148 = vld [vmem:[%s2146 + $0x8] sm:$0xff]
  %v2149 = vld [vmem:[%s2146 + $0x10] sm:$0xff]
  %v2150 = vld [vmem:[%s2146 + $0x18] sm:$0xff]
  %v2152 = vsel %vm105, %v2144, 0
  %v2155 = vsel %vm105, %v2145, 0
  %2157 = vmatpush.msra.mxu0 0.0
  %2158 = vmatpush.msra.mxu0 0.0
  %2159 = vmatpush.msra.mxu0 0.0
  %2160 = vmatpush.msra.mxu0 0.0
  %2161 = vmatpush.msra.mxu0 0.0
  %2162 = vmatpush.msra.mxu0 0.0
  %2163 = vmatpush.msra.mxu0 0.0
  %2164 = vmatpush.msra.mxu0 0.0
  %2165 = vmatpush.msra.mxu0 0.0
  %2166 = vmatpush.msra.mxu0 0.0
  %2167 = vmatpush.msra.mxu0 0.0
  %2168 = vmatpush.msra.mxu0 0.0
  %2169 = vmatpush.msra.mxu0 %v2150
  %2170 = vmatpush.msra.mxu0 %v2149
  %2171 = vmatpush.msra.mxu0 %v2148
  %2172 = vmatpush.msra.mxu0 %v2147
  %2173 = vmatmul.f32.gmra.mxu0 %v2152
  %v2174 = vpop.f32.mrf.mxu0
  %v2175 = vadd.f32 0.0, %v2174
  %2176 = vmatmul.f32.gmra.mxu0 %v2155
  %v2177 = vpop.f32.mrf.mxu0
  %v2178 = vadd.f32 0.0, %v2177
  %2179 = vdwg.mxu0
  %v2180 = vmax.f32 %v2175, 0.0
  %v2181 = vmax.f32 %v2178, 0.0
  %s2182 = scalar_lea.vmem %s10, 128
  %v2183 = vld [vmem:[%s2182] sm:$0xff]
  %v2184 = vld [vmem:[%s2182 + $0x8] sm:$0xff]
  %v2185 = vld [vmem:[%s2182 + $0x10] sm:$0xff]
  %v2186 = vld [vmem:[%s2182 + $0x18] sm:$0xff]
  %v2187 = vld [vmem:[%s2182 + $0x20] sm:$0xff]
  %v2188 = vld [vmem:[%s2182 + $0x28] sm:$0xff]
  %v2189 = vld [vmem:[%s2182 + $0x30] sm:$0xff]
  %v2190 = vld [vmem:[%s2182 + $0x38] sm:$0xff]
  %v2191 = vld [vmem:[%s2182 + $0x40] sm:$0xff]
  %v2192 = vld [vmem:[%s2182 + $0x48] sm:$0xff]
  %v2193 = vld [vmem:[%s2182 + $0x50] sm:$0xff]
  %v2194 = vld [vmem:[%s2182 + $0x58] sm:$0xff]
  %v2195 = vld [vmem:[%s2182 + $0x60] sm:$0xff]
  %v2196 = vld [vmem:[%s2182 + $0x68] sm:$0xff]
  %v2197 = vld [vmem:[%s2182 + $0x70] sm:$0xff]
  %v2198 = vld [vmem:[%s2182 + $0x78] sm:$0xff]
  %2199 = vmatpush.msra.mxu0 %v2198
  %2200 = vmatpush.msra.mxu0 %v2197
  %2201 = vmatpush.msra.mxu0 %v2196
  %2202 = vmatpush.msra.mxu0 %v2195
  %2203 = vmatpush.msra.mxu0 %v2194
  %2204 = vmatpush.msra.mxu0 %v2193
  %2205 = vmatpush.msra.mxu0 %v2192
  %2206 = vmatpush.msra.mxu0 %v2191
  %2207 = vmatpush.msra.mxu0 %v2190
  %2208 = vmatpush.msra.mxu0 %v2189
  %2209 = vmatpush.msra.mxu0 %v2188
  %2210 = vmatpush.msra.mxu0 %v2187
  %2211 = vmatpush.msra.mxu0 %v2186
  %2212 = vmatpush.msra.mxu0 %v2185
  %2213 = vmatpush.msra.mxu0 %v2184
  %2214 = vmatpush.msra.mxu0 %v2183
  %2215 = vmatmul.f32.gmra.mxu0 %v2180
  %v2216 = vpop.f32.mrf.mxu0
  %v2217 = vadd.f32 0.0, %v2216
  %2218 = vmatmul.f32.gmra.mxu0 %v2181
  %v2219 = vpop.f32.mrf.mxu0
  %v2220 = vadd.f32 0.0, %v2219
  %2221 = vdwg.mxu0
  %v2222 = vadd.f32 %v2103, %v2217
  %v2223 = vadd.f32 %v2104, %v2220
  %v2224 = vld [vmem:[%s11] sm:$0x1]
  %v2225 = vmul.f32 %v2222, %v2222
  %v2226 = vmul.f32 %v2223, %v2223
  %v2227 = vsel %vm105, %v2225, 0.0
  %2228 = vadd.xlane.f32.xlu0 %v2227
  %v2229 = vpop.xlane.xlu0 %2228
  %v2230 = vsel %vm105, %v2226, 0.0
  %2231 = vadd.xlane.f32.xlu0 %v2230
  %v2232 = vpop.xlane.xlu0 %2231
  %v2233 = vmul.f32 %v2229, %v118
  %v2234 = vmul.f32 %v2232, %v118
  %v2235 = vadd.f32 %v2233, 1e-06
  %v2236 = vadd.f32 %v2234, 1e-06
  %v2237 = vrsqrt.pop %v2235
  %v2238 = vmul.f32 %v2237, %v2235
  %v2239 = vmul.f32 %v2238, %v2237
  %v2240 = vmul.f32 0.5, %v2239
  %v2241 = vsub.f32 1.5, %v2240
  %v2242 = vmul.f32 %v2237, %v2241
  %vm2243 = vweird.f32 %v2235
  %vm2244 = vweird.f32 %v2237
  %vm2245 = vmor %vm2243, %vm2244
  %v2246 = vsel %vm2245, %v2237, %v2242
  %v2247 = vrsqrt.pop %v2236
  %v2248 = vmul.f32 %v2247, %v2236
  %v2249 = vmul.f32 %v2248, %v2247
  %v2250 = vmul.f32 0.5, %v2249
  %v2251 = vsub.f32 1.5, %v2250
  %v2252 = vmul.f32 %v2247, %v2251
  %vm2253 = vweird.f32 %v2236
  %vm2254 = vweird.f32 %v2247
  %vm2255 = vmor %vm2253, %vm2254
  %v2256 = vsel %vm2255, %v2247, %v2252
  %v2257 = vmul.f32 %v2222, %v2246
  %v2258 = vmul.f32 %v2223, %v2256
  %v2260 = vperm.slane %v2224, 0
  %v2262 = vmul.f32 %v2257, %v2260
  %v2263 = vmul.f32 %v2258, %v2260
  %v2264 = vld [vmem:[%s12] sm:$0x7]
  %v2266 = vsel %vm105, %v2264, 0
  %v2269 = vsel %vm105, %v2262, 0
  %2271 = vmatpush.xpose.msra.mxu0 0.0
  %2272 = vmatpush.xpose.msra.mxu0 0.0
  %2273 = vmatpush.xpose.msra.mxu0 0.0
  %2274 = vmatpush.xpose.msra.mxu0 0.0
  %2275 = vmatpush.xpose.msra.mxu0 0.0
  %2276 = vmatpush.xpose.msra.mxu0 0.0
  %2277 = vmatpush.xpose.msra.mxu0 0.0
  %2278 = vmatpush.xpose.msra.mxu0 0.0
  %2279 = vmatpush.xpose.msra.mxu0 0.0
  %2280 = vmatpush.xpose.msra.mxu0 0.0
  %2281 = vmatpush.xpose.msra.mxu0 0.0
  %2282 = vmatpush.xpose.msra.mxu0 0.0
  %2283 = vmatpush.xpose.msra.mxu0 0.0
  %2284 = vmatpush.xpose.msra.mxu0 0.0
  %2285 = vmatpush.xpose.msra.mxu0 0.0
  %2286 = vmatpush.xpose.msra.mxu0 %v2269
  %2287 = vmatmul.f32.gmra.mxu0 %v2266
  %v2288 = vpop.f32.mrf.mxu0
  %v2289 = vadd.f32 0.0, %v2288
  %2290 = vdwg.mxu0
  %v2292 = vsel %vm105, %v2263, 0
  %2294 = vmatpush.xpose.msra.mxu0 0.0
  %2295 = vmatpush.xpose.msra.mxu0 0.0
  %2296 = vmatpush.xpose.msra.mxu0 0.0
  %2297 = vmatpush.xpose.msra.mxu0 0.0
  %2298 = vmatpush.xpose.msra.mxu0 0.0
  %2299 = vmatpush.xpose.msra.mxu0 0.0
  %2300 = vmatpush.xpose.msra.mxu0 0.0
  %2301 = vmatpush.xpose.msra.mxu0 0.0
  %2302 = vmatpush.xpose.msra.mxu0 0.0
  %2303 = vmatpush.xpose.msra.mxu0 0.0
  %2304 = vmatpush.xpose.msra.mxu0 0.0
  %2305 = vmatpush.xpose.msra.mxu0 0.0
  %2306 = vmatpush.xpose.msra.mxu0 0.0
  %2307 = vmatpush.xpose.msra.mxu0 0.0
  %2308 = vmatpush.xpose.msra.mxu0 0.0
  %2309 = vmatpush.xpose.msra.mxu0 %v2292
  %2310 = vmatmul.f32.gmra.mxu0 %v2266
  %v2311 = vpop.f32.mrf.mxu0
  %v2312 = vadd.f32 0.0, %v2311
  %2313 = vdwg.mxu0
  %v2315 = vrot.slane %v44, 1
  %vm2317 = vcmp.gt.f32.partialorder %v44, 0.5
  %vm2318 = vcmp.gt.f32.partialorder %v2315, 0.5
  %v2319 = vsel %vm2317, 1, 0
  %v2320 = vsel %vm2318, 1, 0
  %v2321 = vperm.slane %v2319, 0
  %v2322 = vperm.slane %v2320, 0
  %vm2323 = vcmp.eq.s32.totalorder %v2321, 1
  %vm2324 = vcmp.eq.s32.totalorder %v2322, 1
  %v2325 = vsel %vm2323, %v2289, -10000.0
  %v2326 = vsel %vm2324, %v2312, -10000.0
  %vm2327 = vcmask 59392
  %v2328 = vsel %vm2327, %v2325, -inf
  %2329 = vmax.xlane.f32.xlu0 %v2328
  %v2330 = vpop.xlane.xlu0 %2329
  %v2331 = vsel %vm2327, %v2326, -inf
  %2332 = vmax.xlane.f32.xlu0 %v2331
  %v2333 = vpop.xlane.xlu0 %2332
  %v2334 = vsub.f32 %v2325, %v2330
  %v2335 = vsub.f32 %v2326, %v2333
  %v2336 = vmul.f32 %v2334, 1.442695
  %v2337 = vpow.pop %v2336
  %v2338 = vmul.f32 %v2335, 1.442695
  %v2339 = vpow.pop %v2338
  %v2340 = vsel %vm2327, %v2337, 0.0
  %2341 = vadd.xlane.f32.xlu0 %v2340
  %v2342 = vpop.xlane.xlu0 %2341
  %v2343 = vsel %vm2327, %v2339, 0.0
  %2344 = vadd.xlane.f32.xlu0 %v2343
  %v2345 = vpop.xlane.xlu0 %2344
  %v2346 = vrcp.pop %v2342
  %v2347 = vrcp.pop %v2345
  %v2348 = vmul.f32 %v2337, %v2346
  %v2349 = vmul.f32 %v2339, %v2347
  %v2351 = vsel %vm72, %v2348, 0
  %2353 = vmatpush.msra.mxu0 0.0
  %2354 = vmatpush.msra.mxu0 0.0
  %2355 = vmatpush.msra.mxu0 0.0
  %2356 = vmatpush.msra.mxu0 0.0
  %2357 = vmatpush.msra.mxu0 0.0
  %2358 = vmatpush.msra.mxu0 0.0
  %2359 = vmatpush.msra.mxu0 0.0
  %2360 = vmatpush.msra.mxu0 0.0
  %2361 = vmatpush.msra.mxu0 0.0
  %2362 = vmatpush.msra.mxu0 0.0
  %2363 = vmatpush.msra.mxu0 0.0
  %2364 = vmatpush.msra.mxu0 0.0
  %2365 = vmatpush.msra.mxu0 0.0
  %2366 = vmatpush.msra.mxu0 0.0
  %2367 = vmatpush.msra.mxu0 0.0
  %2368 = vmatpush.msra.mxu0 %v2262
  %2369 = vmatmul.f32.gmra.mxu0 %v2351
  %v2370 = vpop.f32.mrf.mxu0
  %v2371 = vadd.f32 0.0, %v2370
  %2372 = vdwg.mxu0
  %v2374 = vsel %vm72, %v2349, 0
  %2376 = vmatpush.msra.mxu0 0.0
  %2377 = vmatpush.msra.mxu0 0.0
  %2378 = vmatpush.msra.mxu0 0.0
  %2379 = vmatpush.msra.mxu0 0.0
  %2380 = vmatpush.msra.mxu0 0.0
  %2381 = vmatpush.msra.mxu0 0.0
  %2382 = vmatpush.msra.mxu0 0.0
  %2383 = vmatpush.msra.mxu0 0.0
  %2384 = vmatpush.msra.mxu0 0.0
  %2385 = vmatpush.msra.mxu0 0.0
  %2386 = vmatpush.msra.mxu0 0.0
  %2387 = vmatpush.msra.mxu0 0.0
  %2388 = vmatpush.msra.mxu0 0.0
  %2389 = vmatpush.msra.mxu0 0.0
  %2390 = vmatpush.msra.mxu0 0.0
  %2391 = vmatpush.msra.mxu0 %v2263
  %2392 = vmatmul.f32.gmra.mxu0 %v2374
  %v2393 = vpop.f32.mrf.mxu0
  %v2394 = vadd.f32 0.0, %v2393
  %2395 = vdwg.mxu0
  %vm2396 = vcmask 256000
  %2397 = vst.msk [vmem:[%s13] sm:$0x7] %vm2396, %v2371
  %2398 = vst.msk [vmem:[%s13 + $0x4] sm:$0x7] %vm2396, %v2394
  // Predicated region
  $region54: #{tpu_custom_call.1} parent=0 // pred_check
    _
  $region55: #{tpu_custom_call.1} parent=0 // pred_check_branch
    %2400 = sbr.rel (0) target = $region57
  $region56: #{tpu_custom_call.1} parent=0 // pred_region
    _
  $region57: #{tpu_custom_call.1} parent=0 // pred_fallthru
    _
  // Predicated region
  $region58: #{tpu_custom_call.1} parent=0 // pred_check
    _
  $region59: #{tpu_custom_call.1} parent=0 // pred_check_branch
    %2402 = sbr.rel (0) target = $region61
  $region60: #{tpu_custom_call.1} parent=0 // pred_region
    _
  $region61: #{tpu_custom_call.1} parent=0 // pred_fallthru
    _

</llo_original>
